<compile_context>
chip_gen: v7x
topology: tpu7x:2x2x1
jax: 0.10.0
libtpu: 0.0.40
codegen_flags: <defaults>
</compile_context>

<pallas_src>
import functools

import jax
import jax.numpy as jnp
from jax.experimental import pallas as pl
from jax.experimental.pallas import tpu as pltpu


def _round_up(v, m):
    return (v + m - 1) // m * m


def _vmem_limit(byte_need):
    # Never request all of v7x's 64 MiB physical VMEM per TC; 48 MiB leaves
    # headroom for Mosaic internal scratch and is well under v5e/v6e's 128 MiB.
    return int(min(max(2 * byte_need, 32 * 1024 * 1024), 48 * 1024 * 1024))


def _pick_tile_n(d_in_p, h_p, n_bins_p, x_itemsize, budget=24 * 1024 * 1024):
    # Largest item tile whose per-step working set fits the budget: amortizes
    # the ~0.35us/step grid overhead and feeds the MXU with M >= 512.
    for t in (1024, 512, 256, 128):
        need = (2 * t * d_in_p * x_itemsize   # x tile (double-buffered)
                + 2 * t * 4                   # idx tile
                + t * h_p * 4                 # h temporary
                + n_bins_p * t * 4)           # one-hot temporary
        if need <= budget:
            return t
    return 128


# --------------------------- reassociated path ------------------------------
def _reassoc_kernel(idx_ref, x_ref, w1_ref, b1_ref, w2_ref, b2_ref,
                    out_ref, s_ref, cnt_ref, *, n_bins_pad):
    i = pl.program_id(1)                       # item-tile axis ("arbitrary")

    @pl.when(i == 0)
    def _():
        s_ref[...] = jnp.zeros_like(s_ref)
        cnt_ref[...] = jnp.zeros_like(cnt_ref)

    # MLP first layer: bf16 MXU ingest, f32 accumulate; bias/ReLU in f32 (VPU).
    h = jnp.dot(x_ref[...].astype(jnp.bfloat16), w1_ref[...],
                preferred_element_type=jnp.float32)            # (tile_n, h_p)
    h = jnp.maximum(h + b1_ref[...], 0.0)

    # Scatter-add, reassociated: accumulate per-bin sums of h and per-bin
    # counts in f32.  Padded items carry idx == -1 and never match any bin.
    idx = idx_ref[...]                                         # (1, tile_n)
    bin_ids = jax.lax.broadcasted_iota(
        jnp.int32, (n_bins_pad, idx.shape[-1]), 0)
    onehot = (bin_ids == idx).astype(jnp.float32)              # (n_bins_p, tile_n)
    s_ref[...] += jnp.dot(onehot, h, preferred_element_type=jnp.float32)
    cnt_ref[...] += jnp.sum(onehot, axis=1, keepdims=True)

    # Second Linear applied once per output slab (per 'parallel' split).
    @pl.when(i == pl.num_programs(1) - 1)
    def _():
        out_ref[...] = (jnp.dot(s_ref[...], w2_ref[...],
                                preferred_element_type=jnp.float32)
                        + cnt_ref[...] * b2_ref[...])


# ------------------------ large-n_bins fallback path ------------------------
def _onehot_kernel(idx_ref, x_ref, w1_ref, b1_ref, w2_ref, b2_ref,
                   out_ref, *, n_bins_pad):
    i = pl.program_id(1)                       # item-tile axis ("arbitrary")

    @pl.when(i == 0)
    def _():
        out_ref[...] = jnp.zeros_like(out_ref)

    h = jnp.dot(x_ref[...].astype(jnp.bfloat16), w1_ref[...],
                preferred_element_type=jnp.float32)
    h = jnp.maximum(h + b1_ref[...], 0.0)
    y = jnp.dot(h.astype(jnp.bfloat16), w2_ref[...],
                preferred_element_type=jnp.float32)
    y = y + b2_ref[...]

    idx = idx_ref[...]
    bin_ids = jax.lax.broadcasted_iota(
        jnp.int32, (n_bins_pad, idx.shape[-1]), 0)
    onehot = (bin_ids == idx).astype(jnp.bfloat16)              # exact 0/1 mask
    out_ref[...] += jnp.dot(onehot, y.astype(jnp.bfloat16),
                            preferred_element_type=jnp.float32)


def item_encoder(x, idxs, n_bins, params, *, tile_n=None, force_path=None):
    """x: (N, D_in), idxs: (N,) int32 in [0, n_bins), params: MLP weights."""
    w1, b1, w2, b2 = params["w1"], params["b1"], params["w2"], params["b2"]
    n_items, d_in = x.shape
    hidden = w1.shape[1]
    d_out = w2.shape[1]

    LANE, SUB = 128, 8
    d_in_p = _round_up(d_in, LANE)
    h_p = _round_up(hidden, LANE)
    d_out_p = _round_up(d_out, LANE)
    n_bins_p = _round_up(n_bins, SUB)

    if tile_n is None:
        tile_n = _pick_tile_n(d_in_p, h_p, n_bins_p, x.dtype.itemsize)

    # Reassociated path whenever the (n_bins_p, h_p) partial-sum scratch and the
    # untiled one-hot stay cheap; otherwise fall back to the per-tile scatter.
    use_reassoc = (n_bins_p <= 1024
                   and n_bins_p * (h_p + d_out_p) * 4 <= 8 * 1024 * 1024)
    if force_path == "reassoc":
        use_reassoc = True
    elif force_path == "onehot":
        use_reassoc = False

    n_p = _round_up(max(n_items, 1), tile_n)
    n_tiles = n_p // tile_n
    # Split the item axis across two cores (v7x megacore) when there is enough
    # work; partial slabs are summed in the wrapper.  No effect on v5e/v6e.
    n_splits = 2 if (use_reassoc and n_tiles >= 2) else 1
    if n_splits > 1:
        n_p = _round_up(n_p, n_splits * tile_n)
        n_tiles = n_p // tile_n
    tiles_per_split = n_tiles // n_splits

    # --- padding / dtype prep: one fused pass, skipped when not needed -------
    if n_items == n_p and d_in == d_in_p:
        x_p = x                      # no copy: cast to bf16 inside the kernel
    else:
        x_p = jnp.zeros((n_p, d_in_p), jnp.bfloat16
                        ).at[:n_items, :d_in].set(x.astype(jnp.bfloat16))
    idx_p = jnp.full((1, n_p), -1, jnp.int32
                     ).at[0, :n_items].set(idxs.astype(jnp.int32))
    w1_p = jnp.zeros((d_in_p, h_p), jnp.bfloat16
                     ).at[:d_in, :hidden].set(w1.astype(jnp.bfloat16))
    b1_p = jnp.zeros((1, h_p), jnp.float32
                     ).at[:, :hidden].set(b1.reshape(1, hidden).astype(jnp.float32))

    if use_reassoc:
        # w2/b2 are applied once on already-summed f32 data: keep them in f32.
        w2_p = jnp.zeros((h_p, d_out_p), jnp.float32
                         ).at[:hidden, :d_out].set(w2.astype(jnp.float32))
        b2_p = jnp.zeros((1, d_out_p), jnp.float32
                         ).at[:, :d_out].set(b2.reshape(1, d_out).astype(jnp.float32))

        need = (2 * tile_n * d_in_p * x_p.dtype.itemsize   # x (double-buffered)
                + 2 * tile_n * 4                           # idx
                + 2 * (d_in_p * h_p * 2 + h_p * 4)         # w1/b1 (x2 buffers)
                + 2 * (h_p * d_out_p * 4 + d_out_p * 4)    # w2/b2 (x2 buffers)
                + 2 * n_bins_p * d_out_p * 4               # out slab
                + n_bins_p * (h_p + 1) * 4                 # s / cnt scratch
                + tile_n * h_p * 4                         # h temporary
                + n_bins_p * tile_n * 4)                   # one-hot temporary

        kernel = functools.partial(_reassoc_kernel, n_bins_pad=n_bins_p)
        out_p = pl.pallas_call(
            kernel,
            out_shape=jax.ShapeDtypeStruct((n_splits * n_bins_p, d_out_p),
                                           jnp.float32),
            grid_spec=pltpu.PrefetchScalarGridSpec(
                num_scalar_prefetch=0,
                grid=(n_splits, tiles_per_split),
                in_specs=[
                    pl.BlockSpec((1, tile_n),
                                 lambda p, i: (0, p * tiles_per_split + i)),
                    pl.BlockSpec((tile_n, d_in_p),
                                 lambda p, i: (p * tiles_per_split + i, 0)),
                    # Resident weights (constant block index).  Single-buffering
                    # them (pl.Buffered(1)) would halve their VMEM footprint on
                    # v7x for large MLPs; left default here for robustness.
                    pl.BlockSpec((d_in_p, h_p), lambda p, i: (0, 0)),
                    pl.BlockSpec((1, h_p),      lambda p, i: (0, 0)),
                    pl.BlockSpec((h_p, d_out_p), lambda p, i: (0, 0)),
                    pl.BlockSpec((1, d_out_p),  lambda p, i: (0, 0)),
                ],
                out_specs=pl.BlockSpec((n_bins_p, d_out_p),
                                       lambda p, i: (p, 0)),
                scratch_shapes=[pltpu.VMEM((n_bins_p, h_p), jnp.float32),
                                pltpu.VMEM((n_bins_p, 1), jnp.float32)],
            ),
            compiler_params=pltpu.CompilerParams(
                dimension_semantics=("parallel", "arbitrary"),
                vmem_limit_bytes=_vmem_limit(need),
            ),
        )(idx_p, x_p, w1_p, b1_p, w2_p, b2_p)

        out_p = out_p.reshape(n_splits, n_bins_p, d_out_p)
        out = out_p.sum(axis=0) if n_splits > 1 else out_p[0]
        return out[:n_bins, :d_out]

    # ---------------- large-n_bins fallback: per-tile one-hot scatter --------
    w2_p = jnp.zeros((h_p, d_out_p), jnp.bfloat16
                     ).at[:hidden, :d_out].set(w2.astype(jnp.bfloat16))
    b2_p = jnp.zeros((1, d_out_p), jnp.float32
                     ).at[:, :d_out].set(b2.reshape(1, d_out).astype(jnp.float32))

    # Prefer a single d_out tile (no MLP recompute / x re-streaming per j);
    # only tile d_out when the w2 slice + out block would blow the budget.
    if 2 * h_p * d_out_p * 2 + n_bins_p * d_out_p * 4 <= 16 * 1024 * 1024:
        tile_dout = d_out_p
    elif d_out_p % 256 == 0:
        tile_dout = 256
    else:
        tile_dout = 128

    need = (2 * tile_n * d_in_p * x_p.dtype.itemsize
            + 2 * tile_n * 4
            + 2 * (d_in_p * h_p * 2 + h_p * 4)
            + 2 * (h_p * tile_dout * 2 + tile_dout * 4)
            + 2 * n_bins_p * tile_dout * 4
            + tile_n * (h_p + tile_dout) * 4
            + n_bins_p * tile_n * 2)

    kernel = functools.partial(_onehot_kernel, n_bins_pad=n_bins_p)
    out_p = pl.pallas_call(
        kernel,
        out_shape=jax.ShapeDtypeStruct((n_bins_p, d_out_p), jnp.float32),
        grid_spec=pltpu.PrefetchScalarGridSpec(
            num_scalar_prefetch=0,
            grid=(d_out_p // tile_dout, n_tiles),
            in_specs=[
                pl.BlockSpec((1, tile_n),       lambda j, i: (0, i)),
                pl.BlockSpec((tile_n, d_in_p),  lambda j, i: (i, 0)),
                pl.BlockSpec((d_in_p, h_p),     lambda j, i: (0, 0)),
                pl.BlockSpec((1, h_p),          lambda j, i: (0, 0)),
                pl.BlockSpec((h_p, tile_dout),  lambda j, i: (0, j)),
                pl.BlockSpec((1, tile_dout),    lambda j, i: (0, j)),
            ],
            out_specs=pl.BlockSpec((n_bins_p, tile_dout), lambda j, i: (0, j)),
        ),
        compiler_params=pltpu.CompilerParams(
            dimension_semantics=("parallel", "arbitrary"),
            vmem_limit_bytes=_vmem_limit(need),
        ),
    )(idx_p, x_p, w1_p, b1_p, w2_p, b2_p)
    return out_p[:n_bins, :d_out]


def _reference(x, idxs, n_bins, params):
    h = jnp.maximum(x @ params["w1"] + params["b1"], 0.0)
    y = h @ params["w2"] + params["b2"]
    out = jnp.zeros((n_bins, y.shape[-1]), jnp.float32)
    return out.at[idxs].add(y)


if __name__ == "__main__":
    # Small shapes implied by the forward: x (N_items, D_in), idxs (N_items,).
    # N_ITEMS is big enough that the item grid axis has >1 tile at tile_n=256,
    # exercising the resident-accumulator and the 2-way parallel split.
    N_ITEMS, D_IN, HIDDEN, D_OUT, N_BINS = 1100, 16, 32, 16, 4

    key = jax.random.PRNGKey(0)
    k_x, k_i, k_w1, k_b1, k_w2, k_b2 = jax.random.split(key, 6)

    x = jax.random.normal(k_x, (N_ITEMS, D_IN), dtype=jnp.float32)
    idxs = jax.random.randint(k_i, (N_ITEMS,), 0, N_BINS, dtype=jnp.int32)

    params = {
        "w1": jax.random.normal(k_w1, (D_IN, HIDDEN), jnp.float32) * 0.1,
        "b1": jax.random.normal(k_b1, (1, HIDDEN), jnp.float32) * 0.1,
        "w2": jax.random.normal(k_w2, (HIDDEN, D_OUT), jnp.float32) * 0.1,
        "b2": jax.random.normal(k_b2, (1, D_OUT), jnp.float32) * 0.1,
    }

    ref = _reference(x, idxs, N_BINS, params)

    # Reassociated path, auto tile_n.
    out_a = item_encoder(x, idxs, N_BINS, params)
    jax.block_until_ready(out_a)
    assert out_a.shape == (N_BINS, D_OUT)
    assert jnp.allclose(out_a, ref, atol=1e-1, rtol=2e-2), (
        float(jnp.max(jnp.abs(out_a - ref))))

    # Reassociated path, small tile_n -> multi-step accumulation + 2-way split.
    out_b = item_encoder(x, idxs, N_BINS, params, tile_n=256)
    jax.block_until_ready(out_b)
    assert jnp.allclose(out_b, ref, atol=1e-1, rtol=2e-2), (
        float(jnp.max(jnp.abs(out_b - ref))))

    # Large-n_bins fallback path (forced here for coverage).
    out_c = item_encoder(x, idxs, N_BINS, params, tile_n=256,
                         force_path="onehot")
    jax.block_until_ready(out_c)
    assert jnp.allclose(out_c, ref, atol=1e-1, rtol=2e-2), (
        float(jnp.max(jnp.abs(out_c - ref))))

    print("KERNEL_OK")
</pallas_src>

<mosaic_0001>
module attributes {stable_mosaic.version = 11 : i64} {
  func.func @_reassoc_kernel(%arg0: i32, %arg1: i32, %arg2: memref<1x1024xi32, #tpu.memory_space<vmem>>, %arg3: memref<1024x128xbf16, #tpu.memory_space<vmem>>, %arg4: memref<128x128xbf16, #tpu.memory_space<vmem>>, %arg5: memref<1x128xf32, #tpu.memory_space<vmem>>, %arg6: memref<128x128xf32, #tpu.memory_space<vmem>>, %arg7: memref<1x128xf32, #tpu.memory_space<vmem>>, %arg8: memref<8x128xf32, #tpu.memory_space<vmem>>, %arg9: memref<8x128xf32, #tpu.memory_space<vmem>>, %arg10: memref<8x1xf32, #tpu.memory_space<vmem>>) attributes {dimension_semantics = [#tpu.dimension_semantics<parallel>, #tpu.dimension_semantics<arbitrary>], iteration_bounds = array<i64: 2, 1>, scalar_prefetch = 0 : i64, scratch_operands = 2 : i64, tpu.core_type = #tpu.core_type<tc>, window_params = [{transform_indices = @transform_0, window_bounds = array<i64: 1, 1024>}, {transform_indices = @transform_1, window_bounds = array<i64: 1024, 128>}, {pipeline_mode = #tpu.pipeline_mode<synchronous>, transform_indices = @transform_2, window_bounds = array<i64: 128, 128>}, {pipeline_mode = #tpu.pipeline_mode<synchronous>, transform_indices = @transform_3, window_bounds = array<i64: 1, 128>}, {pipeline_mode = #tpu.pipeline_mode<synchronous>, transform_indices = @transform_4, window_bounds = array<i64: 128, 128>}, {pipeline_mode = #tpu.pipeline_mode<synchronous>, transform_indices = @transform_5, window_bounds = array<i64: 1, 128>}, {transform_indices = @transform_6, window_bounds = array<i64: 8, 128>}]} {
    %c0_i32 = arith.constant 0 : i32
    %0 = arith.cmpi eq, %arg1, %c0_i32 : i32
    %1 = arith.extui %0 : i1 to i32
    %c0_i32_0 = arith.constant 0 : i32
    %2 = arith.cmpi ne, %1, %c0_i32_0 : i32
    scf.if %2 {
      %cst_21 = arith.constant 0.000000e+00 : f32
      %29 = vector.broadcast %cst_21 : f32 to vector<8x128xf32>
      %c0_22 = arith.constant 0 : index
      %c0_23 = arith.constant 0 : index
      %30 = vector.load %arg9[%c0_22, %c0_23] : memref<8x128xf32, #tpu.memory_space<vmem>>, vector<8x128xf32>
      tpu.vector_store %arg9[%c0_22, %c0_23], %29 {strides = array<i32>} : memref<8x128xf32, #tpu.memory_space<vmem>>, vector<8x128xf32>,
      %cst_24 = arith.constant 0.000000e+00 : f32
      %31 = vector.broadcast %cst_24 : f32 to vector<8x1xf32>
      %c0_25 = arith.constant 0 : index
      %c0_26 = arith.constant 0 : index
      %32 = vector.load %arg10[%c0_25, %c0_26] : memref<8x1xf32, #tpu.memory_space<vmem>>, vector<8x1xf32>
      tpu.vector_store %arg10[%c0_25, %c0_26], %31 {strides = array<i32>} : memref<8x1xf32, #tpu.memory_space<vmem>>, vector<8x1xf32>,
    } else {
    }
    %c0 = arith.constant 0 : index
    %c0_1 = arith.constant 0 : index
    %3 = vector.load %arg3[%c0, %c0_1] : memref<1024x128xbf16, #tpu.memory_space<vmem>>, vector<1024x128xbf16>
    %c0_2 = arith.constant 0 : index
    %c0_3 = arith.constant 0 : index
    %4 = vector.load %arg4[%c0_2, %c0_3] : memref<128x128xbf16, #tpu.memory_space<vmem>>, vector<128x128xbf16>
    %cst = arith.constant dense<0.000000e+00> : vector<1024x128xf32>
    %5 = tpu.matmul %3, %4, %cst {dimension_numbers = #tpu.dot_dimension_numbers<[1], [0], [0], [1], [0, 0, 1, 1], [], []>} : vector<1024x128xbf16>, vector<128x128xbf16>, vector<1024x128xf32> -> vector<1024x128xf32>
    %c0_4 = arith.constant 0 : index
    %c0_5 = arith.constant 0 : index
    %6 = vector.load %arg5[%c0_4, %c0_5] : memref<1x128xf32, #tpu.memory_space<vmem>>, vector<1x128xf32>
    %7 = vector.broadcast %6 : vector<1x128xf32> to vector<1024x128xf32>
    %8 = arith.addf %5, %7 : vector<1024x128xf32>
    %cst_6 = arith.constant 0.000000e+00 : f32
    %9 = vector.broadcast %cst_6 : f32 to vector<1024x128xf32>
    %10 = arith.maximumf %8, %9 : vector<1024x128xf32>
    %c0_7 = arith.constant 0 : index
    %c0_8 = arith.constant 0 : index
    %11 = vector.load %arg2[%c0_7, %c0_8] : memref<1x1024xi32, #tpu.memory_space<vmem>>, vector<1x1024xi32>
    %12 = tpu.iota {dimensions = array<i32: 0>} : vector<8x1024xi32>
    %13 = vector.broadcast %11 : vector<1x1024xi32> to vector<8x1024xi32>
    %14 = arith.cmpi eq, %12, %13 : vector<8x1024xi32>
    %15 = arith.extui %14 : vector<8x1024xi1> to vector<8x1024xi32>
    %16 = arith.sitofp %15 : vector<8x1024xi32> to vector<8x1024xf32>
    %c0_9 = arith.constant 0 : index
    %c0_10 = arith.constant 0 : index
    %17 = vector.load %arg9[%c0_9, %c0_10] : memref<8x128xf32, #tpu.memory_space<vmem>>, vector<8x128xf32>
    %cst_11 = arith.constant dense<0.000000e+00> : vector<8x128xf32>
    %18 = tpu.matmul %16, %10, %cst_11 {dimension_numbers = #tpu.dot_dimension_numbers<[1], [0], [0], [1], [0, 0, 1, 1], [], []>} : vector<8x1024xf32>, vector<1024x128xf32>, vector<8x128xf32> -> vector<8x128xf32>
    %19 = arith.addf %17, %18 : vector<8x128xf32>
    %c0_12 = arith.constant 0 : index
    %c0_13 = arith.constant 0 : index
    %20 = vector.load %arg9[%c0_12, %c0_13] : memref<8x128xf32, #tpu.memory_space<vmem>>, vector<8x128xf32>
    tpu.vector_store %arg9[%c0_12, %c0_13], %19 {strides = array<i32>} : memref<8x128xf32, #tpu.memory_space<vmem>>, vector<8x128xf32>,
    %c0_14 = arith.constant 0 : index
    %c0_15 = arith.constant 0 : index
    %21 = vector.load %arg10[%c0_14, %c0_15] : memref<8x1xf32, #tpu.memory_space<vmem>>, vector<8x1xf32>
    %cst_16 = arith.constant dense<0.000000e+00> : vector<8xf32>
    %22 = vector.multi_reduction <add>, %16, %cst_16 [1] : vector<8x1024xf32> to vector<8xf32>
    %23 = vector.shape_cast %22 : vector<8xf32> to vector<8x1xf32>
    %24 = arith.addf %21, %23 : vector<8x1xf32>
    %c0_17 = arith.constant 0 : index
    %c0_18 = arith.constant 0 : index
    %25 = vector.load %arg10[%c0_17, %c0_18] : memref<8x1xf32, #tpu.memory_space<vmem>>, vector<8x1xf32>
    tpu.vector_store %arg10[%c0_17, %c0_18], %24 {strides = array<i32>} : memref<8x1xf32, #tpu.memory_space<vmem>>, vector<8x1xf32>,
    %c0_i32_19 = arith.constant 0 : i32
    %26 = arith.cmpi eq, %arg1, %c0_i32_19 : i32
    %27 = arith.extui %26 : i1 to i32
    %c0_i32_20 = arith.constant 0 : i32
    %28 = arith.cmpi ne, %27, %c0_i32_20 : i32
    scf.if %28 {
      %c0_21 = arith.constant 0 : index
      %c0_22 = arith.constant 0 : index
      %29 = vector.load %arg9[%c0_21, %c0_22] : memref<8x128xf32, #tpu.memory_space<vmem>>, vector<8x128xf32>
      %c0_23 = arith.constant 0 : index
      %c0_24 = arith.constant 0 : index
      %30 = vector.load %arg6[%c0_23, %c0_24] : memref<128x128xf32, #tpu.memory_space<vmem>>, vector<128x128xf32>
      %cst_25 = arith.constant dense<0.000000e+00> : vector<8x128xf32>
      %31 = tpu.matmul %29, %30, %cst_25 {dimension_numbers = #tpu.dot_dimension_numbers<[1], [0], [0], [1], [0, 0, 1, 1], [], []>} : vector<8x128xf32>, vector<128x128xf32>, vector<8x128xf32> -> vector<8x128xf32>
      %c0_26 = arith.constant 0 : index
      %c0_27 = arith.constant 0 : index
      %32 = vector.load %arg10[%c0_26, %c0_27] : memref<8x1xf32, #tpu.memory_space<vmem>>, vector<8x1xf32>
      %c0_28 = arith.constant 0 : index
      %c0_29 = arith.constant 0 : index
      %33 = vector.load %arg7[%c0_28, %c0_29] : memref<1x128xf32, #tpu.memory_space<vmem>>, vector<1x128xf32>
      %34 = vector.broadcast %32 : vector<8x1xf32> to vector<8x128xf32>
      %35 = vector.broadcast %33 : vector<1x128xf32> to vector<8x128xf32>
      %36 = arith.mulf %34, %35 : vector<8x128xf32>
      %37 = arith.addf %31, %36 : vector<8x128xf32>
      %c0_30 = arith.constant 0 : index
      %c0_31 = arith.constant 0 : index
      %38 = vector.load %arg8[%c0_30, %c0_31] : memref<8x128xf32, #tpu.memory_space<vmem>>, vector<8x128xf32>
      tpu.vector_store %arg8[%c0_30, %c0_31], %37 {strides = array<i32>} : memref<8x128xf32, #tpu.memory_space<vmem>>, vector<8x128xf32>,
    } else {
    }
    return
  }
  func.func @transform_0(%arg0: i32, %arg1: i32) -> (i32, i32) {
    %c1_i32 = arith.constant 1 : i32
    %0 = arith.muli %arg0, %c1_i32 : i32
    %1 = arith.addi %0, %arg1 : i32
    %c0_i32 = arith.constant 0 : i32
    %c0_i32_0 = arith.constant 0 : i32
    return %c0_i32, %1 : i32, i32
  }
  func.func @transform_1(%arg0: i32, %arg1: i32) -> (i32, i32) {
    %c1_i32 = arith.constant 1 : i32
    %0 = arith.muli %arg0, %c1_i32 : i32
    %1 = arith.addi %0, %arg1 : i32
    %c0_i32 = arith.constant 0 : i32
    %c0_i32_0 = arith.constant 0 : i32
    return %1, %c0_i32 : i32, i32
  }
  func.func @transform_2(%arg0: i32, %arg1: i32) -> (i32, i32) {
    %c0_i32 = arith.constant 0 : i32
    %c0_i32_0 = arith.constant 0 : i32
    %c0_i32_1 = arith.constant 0 : i32
    return %c0_i32, %c0_i32_0 : i32, i32
  }
  func.func @transform_3(%arg0: i32, %arg1: i32) -> (i32, i32) {
    %c0_i32 = arith.constant 0 : i32
    %c0_i32_0 = arith.constant 0 : i32
    %c0_i32_1 = arith.constant 0 : i32
    return %c0_i32, %c0_i32_0 : i32, i32
  }
  func.func @transform_4(%arg0: i32, %arg1: i32) -> (i32, i32) {
    %c0_i32 = arith.constant 0 : i32
    %c0_i32_0 = arith.constant 0 : i32
    %c0_i32_1 = arith.constant 0 : i32
    return %c0_i32, %c0_i32_0 : i32, i32
  }
  func.func @transform_5(%arg0: i32, %arg1: i32) -> (i32, i32) {
    %c0_i32 = arith.constant 0 : i32
    %c0_i32_0 = arith.constant 0 : i32
    %c0_i32_1 = arith.constant 0 : i32
    return %c0_i32, %c0_i32_0 : i32, i32
  }
  func.func @transform_6(%arg0: i32, %arg1: i32) -> (i32, i32) {
    %c0_i32 = arith.constant 0 : i32
    %c0_i32_0 = arith.constant 0 : i32
    return %arg0, %c0_i32 : i32, i32
  }
}

</mosaic_0001>

<llo_original>
// kernel: tpu_custom_call.1
$region0: #{tpu_custom_call.1}
  #allocation0 [shape = 'u32[]', space=smem, size = 0x4, offset = 0x4, fixed_abs, tag = 'smem constant byte address 0x4 - core index']
  #allocation1 [shape = 'u32[144,128]{1,0:T(1,128)}', space=vmem, size = 0x12000, scoped, tag = 'internal scratch']
  #allocation2 [shape = 'f32[8,128]{1,0:T(8,128)}', space=vmem, size = 0x1000, scoped, tag = 'scratch operand']
  #allocation3 [shape = 'f32[8,1]{1,0:T(8,128)}', space=vmem, size = 0x1000, scoped, tag = 'scratch operand']
  %s0 = inlined_call_operand.hbm [shape: s32[1,2048], index: 0, kind: input, shape index: {}]
  %s1 = inlined_call_operand.hbm [shape: bf16[2048,128], index: 1, kind: input, shape index: {}]
  %s2 = inlined_call_operand.hbm [shape: bf16[128,128], index: 2, kind: input, shape index: {}]
  %s3 = inlined_call_operand.vmem [shape: f32[1,128], index: 3, kind: input, shape index: {}]
  %s4 = inlined_call_operand.hbm [shape: f32[128,128], index: 4, kind: input, shape index: {}]
  %s5 = inlined_call_operand.vmem [shape: f32[1,128], index: 5, kind: input, shape index: {}]
  %s6 = inlined_call_operand.hbm [shape: f32[16,128], index: 6, kind: output, shape index: {}]
  %s7 = sld [smem:[#allocation0]]
  $region81: #{tpu_custom_call.1} parent=0
    _
  %s9 = ssub.s32 1, %s7
  %s10 = scalar_select 0, %s9, %s7
  $region1: #{tpu_custom_call.1} parent=0
    #allocation4 [shape = 'u8[8192]{0}', space=vmem, size = 0x2000, scoped, tag = 'input window, operand 0']
    #allocation5 [shape = 's32[2]{0}', space=sflag, size = 0x8, scoped, tag = 'scoped memory for tpu_custom_call.1']
    #allocation6 [shape = 's32[2]{0}', space=sflag, size = 0x8, scoped, tag = 'scoped memory for tpu_custom_call.1']
    #allocation7 [shape = 'u8[524288]{0}', space=vmem, size = 0x80000, scoped, tag = 'input window, operand 1']
    #allocation8 [shape = 's32[2]{0}', space=sflag, size = 0x8, scoped, tag = 'scoped memory for tpu_custom_call.1']
    #allocation9 [shape = 'u8[32768]{0}', space=vmem, size = 0x8000, scoped, tag = 'input window, operand 2, single buffered']
    #allocation10 [shape = 'u8[65536]{0}', space=vmem, size = 0x10000, scoped, tag = 'input window, operand 4, single buffered']
    #allocation11 [shape = 's32[1]{0}', space=sflag, size = 0x4, scoped, tag = 'scoped memory for tpu_custom_call.1']
    #allocation12 [shape = 'u8[8192]{0}', space=vmem, size = 0x2000, scoped, tag = 'output window, operand 0']
    %11 = vsyncpa [#allocation5], 0
    %s12 = scalar_lea.sflag [#allocation5], 1
    %13 = vsyncpa %s12, 0
    %14 = vsyncpa [#allocation8], 0
    %s15 = scalar_lea.sflag [#allocation8], 1
    %16 = vsyncpa %s15, 0
    %17 = vsyncpa [#allocation11], 0
    %18 = vsyncpa [#allocation6], 0
    %s19 = scalar_lea.sflag [#allocation6], 1
    %20 = vsyncpa %s19, 0
    loop: start=0, step=1, limit=4
    $region2: #{tpu_custom_call.1} parent=1 // loop_pre_header
      _
    $region3: #{tpu_custom_call.1} parent=1 // loop_header
      %s22 = sphi 0, %s26
      %p23 = scmp.ge.s32.totalorder %s22, 4
      %s29 = sphi 0, %s41
      %s30 = sphi 0, %s37
      %s31 = sphi 0, %s29
      %s32 = sphi 0, %s30
      %s33 = sphi 0, %s31
      %s34 = sphi 0, %s32
      %s46 = sphi 0, %s48
      %s49 = sphi 0, %s46
      %s50 = sphi 0, %s49
      %s66 = sphi 0, %s50
      %s74 = sphi 0, %s76
      %s77 = sphi 0, %s74
      %s78 = sphi 0, %s77
      %s94 = sphi 0, %s78
      %s98 = sphi 0, %s98
      %s100 = sphi 0, %s98
      %s101 = sphi 0, %s100
      %s115 = sphi 0, %s101
      %s119 = sphi 0, %s119
      %s121 = sphi 0, %s119
      %s122 = sphi 0, %s121
      %s136 = sphi 0, %s122
      %s140 = sphi 0, %s140
      %s142 = sphi 0, %s140
      %s143 = sphi 0, %s142
      %s157 = sphi 0, %s143
      %s161 = sphi 0, %s161
      %s163 = sphi 0, %s161
      %s164 = sphi 0, %s163
      %s178 = sphi 0, %s164
      %s184 = sphi 0, %s186
      %s187 = sphi 0, %s184
      %s188 = sphi 0, %s187
      %s204 = sphi 0, %s188
    $region4: #{tpu_custom_call.1} parent=1 // loop_header_branch
      %25 = sbr.rel (%p23) target = $region8
    $region5: #{tpu_custom_call.1} parent=1 // loop_body
      %s27 = ssub.s32 %s22, 1
      %s28 = ssub.s32 %s22, 2
      %s35 = sadd.s32 1, %s30
      %p36 = scmp.ge.s32.totalorder %s35, 1
      %s37 = scalar_select %p36, 0, %s35
      %s38 = sadd.s32 1, %s29
      %s39 = scalar_select %p36, %s38, %s29
      %p40 = scmp.ge.s32.totalorder %s39, 2
      %s41 = scalar_select %p40, 0, %s39
      %s42 = sadd.s32 %s29, %s30
      %s43 = sadd.s32 %s41, %s37
      %s44 = ssub.s32 %s42, %s43
      %p45 = scmp.eq.s32.totalorder %s44, 0
      %s47 = sadd.s32 %s46, 1
      %s48 = scalar_select %p45, %s46, %s47
      %p51 = pneg %p45
      %p52 = scmp.eq.s32.totalorder %s22, 1
      %p53 = por %p51, %p52
      %p54 = scmp.ne.s32.totalorder %s46, %s49
      %p55 = scmp.eq.s32.totalorder %s22, 0
      %p56 = por %p54, %p55
      %p57 = scmp.ne.s32.totalorder %s46, %s49
      %p58 = scmp.eq.s32.totalorder %s27, 1
      %p59 = por %p57, %p58
      %p60 = scmp.ne.s32.totalorder %s49, %s50
      %p61 = scmp.eq.s32.totalorder %s27, 0
      %p62 = por %p60, %p61
      %p63 = scmp.ne.s32.totalorder %s49, %s50
      %p64 = scmp.eq.s32.totalorder %s28, 1
      %p65 = por %p63, %p64
      %p67 = scmp.ne.s32.totalorder %s50, %s66
      %p68 = scmp.eq.s32.totalorder %s28, 0
      %p69 = por %p67, %p68
      %s70 = sadd.s32 %s29, %s30
      %s71 = sadd.s32 %s41, %s37
      %s72 = ssub.s32 %s70, %s71
      %p73 = scmp.eq.s32.totalorder %s72, 0
      %s75 = sadd.s32 %s74, 1
      %s76 = scalar_select %p73, %s74, %s75
      %p79 = pneg %p73
      %p80 = scmp.eq.s32.totalorder %s22, 1
      %p81 = por %p79, %p80
      %p82 = scmp.ne.s32.totalorder %s74, %s77
      %p83 = scmp.eq.s32.totalorder %s22, 0
      %p84 = por %p82, %p83
      %p85 = scmp.ne.s32.totalorder %s74, %s77
      %p86 = scmp.eq.s32.totalorder %s27, 1
      %p87 = por %p85, %p86
      %p88 = scmp.ne.s32.totalorder %s77, %s78
      %p89 = scmp.eq.s32.totalorder %s27, 0
      %p90 = por %p88, %p89
      %p91 = scmp.ne.s32.totalorder %s77, %s78
      %p92 = scmp.eq.s32.totalorder %s28, 1
      %p93 = por %p91, %p92
      %p95 = scmp.ne.s32.totalorder %s78, %s94
      %p96 = scmp.eq.s32.totalorder %s28, 0
      %p97 = por %p95, %p96
      %s99 = sadd.s32 %s98, 1
      %p102 = scmp.eq.s32.totalorder %s22, 1
      %p103 = scmp.ne.s32.totalorder %s98, %s100
      %p104 = scmp.eq.s32.totalorder %s22, 0
      %p105 = por %p103, %p104
      %p106 = scmp.ne.s32.totalorder %s98, %s100
      %p107 = scmp.eq.s32.totalorder %s27, 1
      %p108 = por %p106, %p107
      %p109 = scmp.ne.s32.totalorder %s100, %s101
      %p110 = scmp.eq.s32.totalorder %s27, 0
      %p111 = por %p109, %p110
      %p112 = scmp.ne.s32.totalorder %s100, %s101
      %p113 = scmp.eq.s32.totalorder %s28, 1
      %p114 = por %p112, %p113
      %p116 = scmp.ne.s32.totalorder %s101, %s115
      %p117 = scmp.eq.s32.totalorder %s28, 0
      %p118 = por %p116, %p117
      %s120 = sadd.s32 %s119, 1
      %p123 = scmp.eq.s32.totalorder %s22, 1
      %p124 = scmp.ne.s32.totalorder %s119, %s121
      %p125 = scmp.eq.s32.totalorder %s22, 0
      %p126 = por %p124, %p125
      %p127 = scmp.ne.s32.totalorder %s119, %s121
      %p128 = scmp.eq.s32.totalorder %s27, 1
      %p129 = por %p127, %p128
      %p130 = scmp.ne.s32.totalorder %s121, %s122
      %p131 = scmp.eq.s32.totalorder %s27, 0
      %p132 = por %p130, %p131
      %p133 = scmp.ne.s32.totalorder %s121, %s122
      %p134 = scmp.eq.s32.totalorder %s28, 1
      %p135 = por %p133, %p134
      %p137 = scmp.ne.s32.totalorder %s122, %s136
      %p138 = scmp.eq.s32.totalorder %s28, 0
      %p139 = por %p137, %p138
      %s141 = sadd.s32 %s140, 1
      %p144 = scmp.eq.s32.totalorder %s22, 1
      %p145 = scmp.ne.s32.totalorder %s140, %s142
      %p146 = scmp.eq.s32.totalorder %s22, 0
      %p147 = por %p145, %p146
      %p148 = scmp.ne.s32.totalorder %s140, %s142
      %p149 = scmp.eq.s32.totalorder %s27, 1
      %p150 = por %p148, %p149
      %p151 = scmp.ne.s32.totalorder %s142, %s143
      %p152 = scmp.eq.s32.totalorder %s27, 0
      %p153 = por %p151, %p152
      %p154 = scmp.ne.s32.totalorder %s142, %s143
      %p155 = scmp.eq.s32.totalorder %s28, 1
      %p156 = por %p154, %p155
      %p158 = scmp.ne.s32.totalorder %s143, %s157
      %p159 = scmp.eq.s32.totalorder %s28, 0
      %p160 = por %p158, %p159
      %s162 = sadd.s32 %s161, 1
      %p165 = scmp.eq.s32.totalorder %s22, 1
      %p166 = scmp.ne.s32.totalorder %s161, %s163
      %p167 = scmp.eq.s32.totalorder %s22, 0
      %p168 = por %p166, %p167
      %p169 = scmp.ne.s32.totalorder %s161, %s163
      %p170 = scmp.eq.s32.totalorder %s27, 1
      %p171 = por %p169, %p170
      %p172 = scmp.ne.s32.totalorder %s163, %s164
      %p173 = scmp.eq.s32.totalorder %s27, 0
      %p174 = por %p172, %p173
      %p175 = scmp.ne.s32.totalorder %s163, %s164
      %p176 = scmp.eq.s32.totalorder %s28, 1
      %p177 = por %p175, %p176
      %p179 = scmp.ne.s32.totalorder %s164, %s178
      %p180 = scmp.eq.s32.totalorder %s28, 0
      %p181 = por %p179, %p180
      %s182 = ssub.s32 %s29, %s41
      %p183 = scmp.eq.s32.totalorder %s182, 0
      %s185 = sadd.s32 %s184, 1
      %s186 = scalar_select %p183, %s184, %s185
      %p189 = pneg %p183
      %p190 = scmp.eq.s32.totalorder %s22, 1
      %p191 = por %p189, %p190
      %p192 = scmp.ne.s32.totalorder %s184, %s187
      %p193 = scmp.eq.s32.totalorder %s22, 0
      %p194 = por %p192, %p193
      %p195 = scmp.ne.s32.totalorder %s184, %s187
      %p196 = scmp.eq.s32.totalorder %s27, 1
      %p197 = por %p195, %p196
      %p198 = scmp.ne.s32.totalorder %s187, %s188
      %p199 = scmp.eq.s32.totalorder %s27, 0
      %p200 = por %p198, %p199
      %p201 = scmp.ne.s32.totalorder %s187, %s188
      %p202 = scmp.eq.s32.totalorder %s28, 1
      %p203 = por %p201, %p202
      %p205 = scmp.ne.s32.totalorder %s188, %s204
      %p206 = scmp.eq.s32.totalorder %s28, 0
      %p207 = por %p205, %p206
      %p208 = scmp.le.s32.totalorder 1, %s22
      %p209 = scmp.lt.s32.totalorder %s22, 3
      %p210 = pnand %p208, %p209
      %p211 = pneg %p210
      // Predicated region
      $region9: #{tpu_custom_call.1} parent=5 // pred_check
        _
      $region10: #{tpu_custom_call.1} parent=5 // pred_check_branch
        %213 = sbr.rel (%p210) target = $region12
      $region11: #{tpu_custom_call.1} parent=5 // pred_region
        %s214 = ssub.s32 %s22, 1
        // Predicated region
        $region13: #{tpu_custom_call.1} parent=11 // pred_check
          %p215 = pneg %p111
        $region14: #{tpu_custom_call.1} parent=11 // pred_check_branch
          %217 = sbr.rel (%p215) target = $region16
        $region15: #{tpu_custom_call.1} parent=11 // pred_region
          %s219 = ssub.s32 1024, 1024
          %220 = vsyncadd [#allocation8], %s219
          %s221 = sshll.u32 [#allocation9], 4
          %s222 = int_to_ptr.vmem [resolvable:$true] %s221
          %227 = dma.hbm_to_vmem [thread:$0]  %s2, 1024, %s222, [#allocation8], 64, 64, 4
        $region16: #{tpu_custom_call.1} parent=11 // pred_fallthru
          _
        // Predicated region
        $region17: #{tpu_custom_call.1} parent=11 // pred_check
          %p228 = pneg %p132
        $region18: #{tpu_custom_call.1} parent=11 // pred_check_branch
          %230 = sbr.rel (%p228) target = $region20
        $region19: #{tpu_custom_call.1} parent=11 // pred_region
          _
        $region20: #{tpu_custom_call.1} parent=11 // pred_fallthru
          _
        // Predicated region
        $region21: #{tpu_custom_call.1} parent=11 // pred_check
          %p231 = pneg %p153
        $region22: #{tpu_custom_call.1} parent=11 // pred_check_branch
          %233 = sbr.rel (%p231) target = $region24
        $region23: #{tpu_custom_call.1} parent=11 // pred_region
          %s235 = ssub.s32 2048, 2048
          %236 = vsyncadd [#allocation11], %s235
          %s237 = sshll.u32 [#allocation10], 4
          %s238 = int_to_ptr.vmem [resolvable:$true] %s237
          %243 = dma.hbm_to_vmem [thread:$0]  %s4, 2048, %s238, [#allocation11], 128, 128, 8
        $region24: #{tpu_custom_call.1} parent=11 // pred_fallthru
          _
        // Predicated region
        $region25: #{tpu_custom_call.1} parent=11 // pred_check
          %p244 = pneg %p174
        $region26: #{tpu_custom_call.1} parent=11 // pred_check_branch
          %246 = sbr.rel (%p244) target = $region28
        $region27: #{tpu_custom_call.1} parent=11 // pred_region
          _
        $region28: #{tpu_custom_call.1} parent=11 // pred_fallthru
          _
      $region12: #{tpu_custom_call.1} parent=5 // pred_fallthru
        _
      %p247 = scmp.lt.s32.totalorder %s22, 2
      // Predicated region
      $region29: #{tpu_custom_call.1} parent=5 // pred_check
        %p248 = pneg %p247
      $region30: #{tpu_custom_call.1} parent=5 // pred_check_branch
        %250 = sbr.rel (%p248) target = $region32
      $region31: #{tpu_custom_call.1} parent=5 // pred_region
        // Predicated region
        $region33: #{tpu_custom_call.1} parent=31 // pred_check
          %p251 = pneg %p56
        $region34: #{tpu_custom_call.1} parent=31 // pred_check_branch
          %253 = sbr.rel (%p251) target = $region36
        $region35: #{tpu_custom_call.1} parent=31 // pred_region
          %s254 = sand.u32 %s46, 1
          %s255 = scalar_lea.sflag [#allocation5], %s254
          %s256 = sand.u32 %s46, 1
          %s257 = smul.addr %s256, 8
          %s258 = scalar_lea.vmem [#allocation4], %s257
          %s259 = sadd.s32 %s29, %s30
          %s260 = smul.u32 8, %s259
          %s262 = ssub.s32 128, 128
          %263 = vsyncadd %s255, %s262
          %s264 = smul.addr %s260, 16
          %s265 = scalar_lea.hbm %s0, %s264
          %s267 = sshll.u32 %s258, 4
          %s268 = int_to_ptr.vmem [resolvable:$true] %s267
          %270 = dma.hbm_to_vmem [thread:$0]  %s265, 128, %s268, %s255
        $region36: #{tpu_custom_call.1} parent=31 // pred_fallthru
          _
        // Predicated region
        $region37: #{tpu_custom_call.1} parent=31 // pred_check
          %p271 = pneg %p84
        $region38: #{tpu_custom_call.1} parent=31 // pred_check_branch
          %273 = sbr.rel (%p271) target = $region40
        $region39: #{tpu_custom_call.1} parent=31 // pred_region
          %s274 = sand.u32 %s22, 1
          %s275 = scalar_lea.sflag [#allocation8], %s274
          %s276 = sand.u32 %s74, 1
          %s277 = smul.addr %s276, 512
          %s278 = scalar_lea.vmem [#allocation7], %s277
          %s279 = sadd.s32 %s29, %s30
          %s280 = smul.u32 128, %s279
          %s282 = ssub.s32 8192, 8192
          %283 = vsyncadd %s275, %s282
          %s284 = smul.addr %s280, 64
          %s285 = scalar_lea.hbm %s1, %s284
          %s286 = sshll.u32 %s278, 4
          %s287 = int_to_ptr.vmem [resolvable:$true] %s286
          %292 = dma.hbm_to_vmem [thread:$0]  %s285, 8192, %s287, %s275, 64, 64, 4
        $region40: #{tpu_custom_call.1} parent=31 // pred_fallthru
          _
      $region32: #{tpu_custom_call.1} parent=5 // pred_fallthru
        _
      %p293 = scmp.le.s32.totalorder 1, %s22
      %p294 = scmp.lt.s32.totalorder %s22, 3
      %p295 = pnand %p293, %p294
      %p296 = pneg %p295
      // Predicated region
      $region41: #{tpu_custom_call.1} parent=5 // pred_check
        _
      $region42: #{tpu_custom_call.1} parent=5 // pred_check_branch
        %298 = sbr.rel (%p295) target = $region44
      $region43: #{tpu_custom_call.1} parent=5 // pred_region
        %s299 = ssub.s32 %s22, 1
        %s300 = sand.u32 %s49, 1
        %s301 = scalar_lea.sflag [#allocation5], %s300
        %s302 = sand.u32 %s49, 1
        %s303 = smul.addr %s302, 8
        %s304 = scalar_lea.vmem [#allocation4], %s303
        // Predicated region
        $region45: #{tpu_custom_call.1} parent=43 // pred_check
          %p305 = pneg %p62
        $region46: #{tpu_custom_call.1} parent=43 // pred_check_branch
          %307 = sbr.rel (%p305) target = $region48
        $region47: #{tpu_custom_call.1} parent=43 // pred_region
          %308 = dma.done %s301, 128
        $region48: #{tpu_custom_call.1} parent=43 // pred_fallthru
          _
        %s309 = sand.u32 %s27, 1
        %s310 = scalar_lea.sflag [#allocation8], %s309
        %s311 = sand.u32 %s77, 1
        %s312 = smul.addr %s311, 512
        %s313 = scalar_lea.vmem [#allocation7], %s312
        // Predicated region
        $region49: #{tpu_custom_call.1} parent=43 // pred_check
          %p314 = pneg %p90
        $region50: #{tpu_custom_call.1} parent=43 // pred_check_branch
          %316 = sbr.rel (%p314) target = $region52
        $region51: #{tpu_custom_call.1} parent=43 // pred_region
          %317 = dma.done %s310, 8192
        $region52: #{tpu_custom_call.1} parent=43 // pred_fallthru
          _
        // Predicated region
        $region53: #{tpu_custom_call.1} parent=43 // pred_check
          %p318 = pneg %p111
        $region54: #{tpu_custom_call.1} parent=43 // pred_check_branch
          %320 = sbr.rel (%p318) target = $region56
        $region55: #{tpu_custom_call.1} parent=43 // pred_region
          %321 = dma.done [#allocation8], 1024
        $region56: #{tpu_custom_call.1} parent=43 // pred_fallthru
          _
        // Predicated region
        $region57: #{tpu_custom_call.1} parent=43 // pred_check
          %p322 = pneg %p153
        $region58: #{tpu_custom_call.1} parent=43 // pred_check_branch
          %324 = sbr.rel (%p322) target = $region60
        $region59: #{tpu_custom_call.1} parent=43 // pred_region
          %325 = dma.done [#allocation11], 2048
        $region60: #{tpu_custom_call.1} parent=43 // pred_fallthru
          _
        %s326 = sand.u32 %s49, 1
        %s327 = scalar_lea.sflag [#allocation5], %s326
        %s328 = sand.u32 %s49, 1
        %s329 = smul.addr %s328, 8
        %s330 = scalar_lea.vmem [#allocation4], %s329
        %p331 = pneg %p62
        %p332 = pneg %p59
        %s333 = sand.u32 %s27, 1
        %s334 = scalar_lea.sflag [#allocation8], %s333
        %s335 = sand.u32 %s77, 1
        %s336 = smul.addr %s335, 512
        %s337 = scalar_lea.vmem [#allocation7], %s336
        %p338 = pneg %p90
        %p339 = pneg %p87
        %p340 = pneg %p111
        %p341 = pneg %p108
        %p342 = pneg %p132
        %p343 = pneg %p129
        %p344 = pneg %p153
        %p345 = pneg %p150
        %p346 = pneg %p174
        %p347 = pneg %p171
        %p348 = pneg %p200
        %p349 = pneg %p197
        %s350 = sand.u32 %s187, 1
        %s351 = scalar_lea.sflag [#allocation6], %s350
        %s352 = sand.u32 %s187, 1
        %s353 = smul.addr %s352, 8
        %s354 = scalar_lea.vmem [#allocation12], %s353
        %s355 = sadd.s32 %s31, %s32
        %s356 = smul.u32 8, %s355
        %s357 = sadd.s32 %s31, %s32
        %s358 = smul.u32 128, %s357
        %p360 = scmp.eq.s32.totalorder %s32, 0
        // Predicated region
        $region61: #{tpu_custom_call.1} parent=43 // pred_check
          %p361 = pneg %p360
        $region62: #{tpu_custom_call.1} parent=43 // pred_check_branch
          %363 = sbr.rel (%p361) target = $region64
        $region63: #{tpu_custom_call.1} parent=43 // pred_region
          %364 = vst [vmem:[#allocation2] sm:$0xff] 0.0
          %vm365 = vcmask 7168
          %366 = vst.msk [vmem:[#allocation3] sm:$0xff] %vm365, 0.0
        $region64: #{tpu_custom_call.1} parent=43 // pred_fallthru
          _
        %v367 = vld [vmem:[%s313] sm:$0xf]
        %v368 = vld [vmem:[%s313 + $0x4] sm:$0xf]
        %v369 = vld [vmem:[%s313 + $0x8] sm:$0xf]
        %v370 = vld [vmem:[%s313 + $0xc] sm:$0xf]
        %v371 = vld [vmem:[%s313 + $0x10] sm:$0xf]
        %v372 = vld [vmem:[%s313 + $0x14] sm:$0xf]
        %v373 = vld [vmem:[%s313 + $0x18] sm:$0xf]
        %v374 = vld [vmem:[%s313 + $0x1c] sm:$0xf]
        %v375 = vld [vmem:[%s313 + $0x20] sm:$0xf]
        %v376 = vld [vmem:[%s313 + $0x24] sm:$0xf]
        %v377 = vld [vmem:[%s313 + $0x28] sm:$0xf]
        %v378 = vld [vmem:[%s313 + $0x2c] sm:$0xf]
        %v379 = vld [vmem:[%s313 + $0x30] sm:$0xf]
        %v380 = vld [vmem:[%s313 + $0x34] sm:$0xf]
        %v381 = vld [vmem:[%s313 + $0x38] sm:$0xf]
        %v382 = vld [vmem:[%s313 + $0x3c] sm:$0xf]
        %v383 = vld [vmem:[%s313 + $0x40] sm:$0xf]
        %v384 = vld [vmem:[%s313 + $0x44] sm:$0xf]
        %v385 = vld [vmem:[%s313 + $0x48] sm:$0xf]
        %v386 = vld [vmem:[%s313 + $0x4c] sm:$0xf]
        %v387 = vld [vmem:[%s313 + $0x50] sm:$0xf]
        %v388 = vld [vmem:[%s313 + $0x54] sm:$0xf]
        %v389 = vld [vmem:[%s313 + $0x58] sm:$0xf]
        %v390 = vld [vmem:[%s313 + $0x5c] sm:$0xf]
        %v391 = vld [vmem:[%s313 + $0x60] sm:$0xf]
        %v392 = vld [vmem:[%s313 + $0x64] sm:$0xf]
        %v393 = vld [vmem:[%s313 + $0x68] sm:$0xf]
        %v394 = vld [vmem:[%s313 + $0x6c] sm:$0xf]
        %v395 = vld [vmem:[%s313 + $0x70] sm:$0xf]
        %v396 = vld [vmem:[%s313 + $0x74] sm:$0xf]
        %v397 = vld [vmem:[%s313 + $0x78] sm:$0xf]
        %v398 = vld [vmem:[%s313 + $0x7c] sm:$0xf]
        %v399 = vld [vmem:[%s313 + $0x80] sm:$0xf]
        %v400 = vld [vmem:[%s313 + $0x84] sm:$0xf]
        %v401 = vld [vmem:[%s313 + $0x88] sm:$0xf]
        %v402 = vld [vmem:[%s313 + $0x8c] sm:$0xf]
        %v403 = vld [vmem:[%s313 + $0x90] sm:$0xf]
        %v404 = vld [vmem:[%s313 + $0x94] sm:$0xf]
        %v405 = vld [vmem:[%s313 + $0x98] sm:$0xf]
        %v406 = vld [vmem:[%s313 + $0x9c] sm:$0xf]
        %v407 = vld [vmem:[%s313 + $0xa0] sm:$0xf]
        %v408 = vld [vmem:[%s313 + $0xa4] sm:$0xf]
        %v409 = vld [vmem:[%s313 + $0xa8] sm:$0xf]
        %v410 = vld [vmem:[%s313 + $0xac] sm:$0xf]
        %v411 = vld [vmem:[%s313 + $0xb0] sm:$0xf]
        %v412 = vld [vmem:[%s313 + $0xb4] sm:$0xf]
        %v413 = vld [vmem:[%s313 + $0xb8] sm:$0xf]
        %v414 = vld [vmem:[%s313 + $0xbc] sm:$0xf]
        %v415 = vld [vmem:[%s313 + $0xc0] sm:$0xf]
        %v416 = vld [vmem:[%s313 + $0xc4] sm:$0xf]
        %v417 = vld [vmem:[%s313 + $0xc8] sm:$0xf]
        %v418 = vld [vmem:[%s313 + $0xcc] sm:$0xf]
        %v419 = vld [vmem:[%s313 + $0xd0] sm:$0xf]
        %v420 = vld [vmem:[%s313 + $0xd4] sm:$0xf]
        %v421 = vld [vmem:[%s313 + $0xd8] sm:$0xf]
        %v422 = vld [vmem:[%s313 + $0xdc] sm:$0xf]
        %v423 = vld [vmem:[%s313 + $0xe0] sm:$0xf]
        %v424 = vld [vmem:[%s313 + $0xe4] sm:$0xf]
        %v425 = vld [vmem:[%s313 + $0xe8] sm:$0xf]
        %v426 = vld [vmem:[%s313 + $0xec] sm:$0xf]
        %v427 = vld [vmem:[%s313 + $0xf0] sm:$0xf]
        %v428 = vld [vmem:[%s313 + $0xf4] sm:$0xf]
        %v429 = vld [vmem:[%s313 + $0xf8] sm:$0xf]
        %v430 = vld [vmem:[%s313 + $0xfc] sm:$0xf]
        %v431 = vld [vmem:[%s313 + $0x100] sm:$0xf]
        %v432 = vld [vmem:[%s313 + $0x104] sm:$0xf]
        %v433 = vld [vmem:[%s313 + $0x108] sm:$0xf]
        %v434 = vld [vmem:[%s313 + $0x10c] sm:$0xf]
        %v435 = vld [vmem:[%s313 + $0x110] sm:$0xf]
        %v436 = vld [vmem:[%s313 + $0x114] sm:$0xf]
        %v437 = vld [vmem:[%s313 + $0x118] sm:$0xf]
        %v438 = vld [vmem:[%s313 + $0x11c] sm:$0xf]
        %v439 = vld [vmem:[%s313 + $0x120] sm:$0xf]
        %v440 = vld [vmem:[%s313 + $0x124] sm:$0xf]
        %v441 = vld [vmem:[%s313 + $0x128] sm:$0xf]
        %v442 = vld [vmem:[%s313 + $0x12c] sm:$0xf]
        %v443 = vld [vmem:[%s313 + $0x130] sm:$0xf]
        %v444 = vld [vmem:[%s313 + $0x134] sm:$0xf]
        %v445 = vld [vmem:[%s313 + $0x138] sm:$0xf]
        %v446 = vld [vmem:[%s313 + $0x13c] sm:$0xf]
        %v447 = vld [vmem:[%s313 + $0x140] sm:$0xf]
        %v448 = vld [vmem:[%s313 + $0x144] sm:$0xf]
        %v449 = vld [vmem:[%s313 + $0x148] sm:$0xf]
        %v450 = vld [vmem:[%s313 + $0x14c] sm:$0xf]
        %v451 = vld [vmem:[%s313 + $0x150] sm:$0xf]
        %v452 = vld [vmem:[%s313 + $0x154] sm:$0xf]
        %v453 = vld [vmem:[%s313 + $0x158] sm:$0xf]
        %v454 = vld [vmem:[%s313 + $0x15c] sm:$0xf]
        %v455 = vld [vmem:[%s313 + $0x160] sm:$0xf]
        %v456 = vld [vmem:[%s313 + $0x164] sm:$0xf]
        %v457 = vld [vmem:[%s313 + $0x168] sm:$0xf]
        %v458 = vld [vmem:[%s313 + $0x16c] sm:$0xf]
        %v459 = vld [vmem:[%s313 + $0x170] sm:$0xf]
        %v460 = vld [vmem:[%s313 + $0x174] sm:$0xf]
        %v461 = vld [vmem:[%s313 + $0x178] sm:$0xf]
        %v462 = vld [vmem:[%s313 + $0x17c] sm:$0xf]
        %v463 = vld [vmem:[%s313 + $0x180] sm:$0xf]
        %v464 = vld [vmem:[%s313 + $0x184] sm:$0xf]
        %v465 = vld [vmem:[%s313 + $0x188] sm:$0xf]
        %v466 = vld [vmem:[%s313 + $0x18c] sm:$0xf]
        %v467 = vld [vmem:[%s313 + $0x190] sm:$0xf]
        %v468 = vld [vmem:[%s313 + $0x194] sm:$0xf]
        %v469 = vld [vmem:[%s313 + $0x198] sm:$0xf]
        %v470 = vld [vmem:[%s313 + $0x19c] sm:$0xf]
        %v471 = vld [vmem:[%s313 + $0x1a0] sm:$0xf]
        %v472 = vld [vmem:[%s313 + $0x1a4] sm:$0xf]
        %v473 = vld [vmem:[%s313 + $0x1a8] sm:$0xf]
        %v474 = vld [vmem:[%s313 + $0x1ac] sm:$0xf]
        %v475 = vld [vmem:[%s313 + $0x1b0] sm:$0xf]
        %v476 = vld [vmem:[%s313 + $0x1b4] sm:$0xf]
        %v477 = vld [vmem:[%s313 + $0x1b8] sm:$0xf]
        %v478 = vld [vmem:[%s313 + $0x1bc] sm:$0xf]
        %v479 = vld [vmem:[%s313 + $0x1c0] sm:$0xf]
        %v480 = vld [vmem:[%s313 + $0x1c4] sm:$0xf]
        %v481 = vld [vmem:[%s313 + $0x1c8] sm:$0xf]
        %v482 = vld [vmem:[%s313 + $0x1cc] sm:$0xf]
        %v483 = vld [vmem:[%s313 + $0x1d0] sm:$0xf]
        %v484 = vld [vmem:[%s313 + $0x1d4] sm:$0xf]
        %v485 = vld [vmem:[%s313 + $0x1d8] sm:$0xf]
        %v486 = vld [vmem:[%s313 + $0x1dc] sm:$0xf]
        %v487 = vld [vmem:[%s313 + $0x1e0] sm:$0xf]
        %v488 = vld [vmem:[%s313 + $0x1e4] sm:$0xf]
        %v489 = vld [vmem:[%s313 + $0x1e8] sm:$0xf]
        %v490 = vld [vmem:[%s313 + $0x1ec] sm:$0xf]
        %v491 = vld [vmem:[%s313 + $0x1f0] sm:$0xf]
        %v492 = vld [vmem:[%s313 + $0x1f4] sm:$0xf]
        %v493 = vld [vmem:[%s313 + $0x1f8] sm:$0xf]
        %v494 = vld [vmem:[%s313 + $0x1fc] sm:$0xf]
        %v495 = vld [vmem:[#allocation9] sm:$0xf]
        %v496 = vld [vmem:[#allocation9 + $0x4] sm:$0xf]
        %v497 = vld [vmem:[#allocation9 + $0x8] sm:$0xf]
        %v498 = vld [vmem:[#allocation9 + $0xc] sm:$0xf]
        %v499 = vld [vmem:[#allocation9 + $0x10] sm:$0xf]
        %v500 = vld [vmem:[#allocation9 + $0x14] sm:$0xf]
        %v501 = vld [vmem:[#allocation9 + $0x18] sm:$0xf]
        %v502 = vld [vmem:[#allocation9 + $0x1c] sm:$0xf]
        %v503 = vld [vmem:[#allocation9 + $0x20] sm:$0xf]
        %v504 = vld [vmem:[#allocation9 + $0x24] sm:$0xf]
        %v505 = vld [vmem:[#allocation9 + $0x28] sm:$0xf]
        %v506 = vld [vmem:[#allocation9 + $0x2c] sm:$0xf]
        %v507 = vld [vmem:[#allocation9 + $0x30] sm:$0xf]
        %v508 = vld [vmem:[#allocation9 + $0x34] sm:$0xf]
        %v509 = vld [vmem:[#allocation9 + $0x38] sm:$0xf]
        %v510 = vld [vmem:[#allocation9 + $0x3c] sm:$0xf]
        %v511 = vld [vmem:[%s3] sm:$0x1]
        %v513 = vlaneseq
        %v514 = vshrl.u32 %v513, 7
        %v515 = vsub.s32 0, %v514
        %v516 = vrot.slane %v511, %v515
        %v646 = vunpack.c.l.b16 %v367
        %v647 = vunpack.c.l.b16 %v368
        %v648 = vunpack.c.l.b16 %v369
        %v649 = vunpack.c.l.b16 %v370
        %v650 = vunpack.c.l.b16 %v371
        %v651 = vunpack.c.l.b16 %v372
        %v652 = vunpack.c.l.b16 %v373
        %v653 = vunpack.c.l.b16 %v374
        %v654 = vunpack.c.l.b16 %v375
        %v655 = vunpack.c.l.b16 %v376
        %v656 = vunpack.c.l.b16 %v377
        %v657 = vunpack.c.l.b16 %v378
        %v658 = vunpack.c.l.b16 %v379
        %v659 = vunpack.c.l.b16 %v380
        %v660 = vunpack.c.l.b16 %v381
        %v661 = vunpack.c.l.b16 %v382
        %v662 = vunpack.c.l.b16 %v383
        %v663 = vunpack.c.l.b16 %v384
        %v664 = vunpack.c.l.b16 %v385
        %v665 = vunpack.c.l.b16 %v386
        %v666 = vunpack.c.l.b16 %v387
        %v667 = vunpack.c.l.b16 %v388
        %v668 = vunpack.c.l.b16 %v389
        %v669 = vunpack.c.l.b16 %v390
        %v670 = vunpack.c.l.b16 %v391
        %v671 = vunpack.c.l.b16 %v392
        %v672 = vunpack.c.l.b16 %v393
        %v673 = vunpack.c.l.b16 %v394
        %v674 = vunpack.c.l.b16 %v395
        %v675 = vunpack.c.l.b16 %v396
        %v676 = vunpack.c.l.b16 %v397
        %v677 = vunpack.c.l.b16 %v398
        %v678 = vunpack.c.l.b16 %v399
        %v679 = vunpack.c.l.b16 %v400
        %v680 = vunpack.c.l.b16 %v401
        %v681 = vunpack.c.l.b16 %v402
        %v682 = vunpack.c.l.b16 %v403
        %v683 = vunpack.c.l.b16 %v404
        %v684 = vunpack.c.l.b16 %v405
        %v685 = vunpack.c.l.b16 %v406
        %v686 = vunpack.c.l.b16 %v407
        %v687 = vunpack.c.l.b16 %v408
        %v688 = vunpack.c.l.b16 %v409
        %v689 = vunpack.c.l.b16 %v410
        %v690 = vunpack.c.l.b16 %v411
        %v691 = vunpack.c.l.b16 %v412
        %v692 = vunpack.c.l.b16 %v413
        %v693 = vunpack.c.l.b16 %v414
        %v694 = vunpack.c.l.b16 %v415
        %v695 = vunpack.c.l.b16 %v416
        %v696 = vunpack.c.l.b16 %v417
        %v697 = vunpack.c.l.b16 %v418
        %v698 = vunpack.c.l.b16 %v419
        %v699 = vunpack.c.l.b16 %v420
        %v700 = vunpack.c.l.b16 %v421
        %v701 = vunpack.c.l.b16 %v422
        %v702 = vunpack.c.l.b16 %v423
        %v703 = vunpack.c.l.b16 %v424
        %v704 = vunpack.c.l.b16 %v425
        %v705 = vunpack.c.l.b16 %v426
        %v706 = vunpack.c.l.b16 %v427
        %v707 = vunpack.c.l.b16 %v428
        %v708 = vunpack.c.l.b16 %v429
        %v709 = vunpack.c.l.b16 %v430
        %v710 = vunpack.c.l.b16 %v431
        %v711 = vunpack.c.l.b16 %v432
        %v712 = vunpack.c.l.b16 %v433
        %v713 = vunpack.c.l.b16 %v434
        %v714 = vunpack.c.l.b16 %v435
        %v715 = vunpack.c.l.b16 %v436
        %v716 = vunpack.c.l.b16 %v437
        %v717 = vunpack.c.l.b16 %v438
        %v718 = vunpack.c.l.b16 %v439
        %v719 = vunpack.c.l.b16 %v440
        %v720 = vunpack.c.l.b16 %v441
        %v721 = vunpack.c.l.b16 %v442
        %v722 = vunpack.c.l.b16 %v443
        %v723 = vunpack.c.l.b16 %v444
        %v724 = vunpack.c.l.b16 %v445
        %v725 = vunpack.c.l.b16 %v446
        %v726 = vunpack.c.l.b16 %v447
        %v727 = vunpack.c.l.b16 %v448
        %v728 = vunpack.c.l.b16 %v449
        %v729 = vunpack.c.l.b16 %v450
        %v730 = vunpack.c.l.b16 %v451
        %v731 = vunpack.c.l.b16 %v452
        %v732 = vunpack.c.l.b16 %v453
        %v733 = vunpack.c.l.b16 %v454
        %v734 = vunpack.c.l.b16 %v455
        %v735 = vunpack.c.l.b16 %v456
        %v736 = vunpack.c.l.b16 %v457
        %v737 = vunpack.c.l.b16 %v458
        %v738 = vunpack.c.l.b16 %v459
        %v739 = vunpack.c.l.b16 %v460
        %v740 = vunpack.c.l.b16 %v461
        %v741 = vunpack.c.l.b16 %v462
        %v742 = vunpack.c.l.b16 %v463
        %v743 = vunpack.c.l.b16 %v464
        %v744 = vunpack.c.l.b16 %v465
        %v745 = vunpack.c.l.b16 %v466
        %v746 = vunpack.c.l.b16 %v467
        %v747 = vunpack.c.l.b16 %v468
        %v748 = vunpack.c.l.b16 %v469
        %v749 = vunpack.c.l.b16 %v470
        %v750 = vunpack.c.l.b16 %v471
        %v751 = vunpack.c.l.b16 %v472
        %v752 = vunpack.c.l.b16 %v473
        %v753 = vunpack.c.l.b16 %v474
        %v754 = vunpack.c.l.b16 %v475
        %v755 = vunpack.c.l.b16 %v476
        %v756 = vunpack.c.l.b16 %v477
        %v757 = vunpack.c.l.b16 %v478
        %v758 = vunpack.c.l.b16 %v479
        %v759 = vunpack.c.l.b16 %v480
        %v760 = vunpack.c.l.b16 %v481
        %v761 = vunpack.c.l.b16 %v482
        %v762 = vunpack.c.l.b16 %v483
        %v763 = vunpack.c.l.b16 %v484
        %v764 = vunpack.c.l.b16 %v485
        %v765 = vunpack.c.l.b16 %v486
        %v766 = vunpack.c.l.b16 %v487
        %v767 = vunpack.c.l.b16 %v488
        %v768 = vunpack.c.l.b16 %v489
        %v769 = vunpack.c.l.b16 %v490
        %v770 = vunpack.c.l.b16 %v491
        %v771 = vunpack.c.l.b16 %v492
        %v772 = vunpack.c.l.b16 %v493
        %v773 = vunpack.c.l.b16 %v494
        %v774 = vpack.c.b16 %v647, %v646
        %v775 = vpack.c.b16 %v649, %v648
        %v776 = vpack.c.b16 %v651, %v650
        %v777 = vpack.c.b16 %v653, %v652
        %v778 = vpack.c.b16 %v655, %v654
        %v779 = vpack.c.b16 %v657, %v656
        %v780 = vpack.c.b16 %v659, %v658
        %v781 = vpack.c.b16 %v661, %v660
        %v782 = vpack.c.b16 %v663, %v662
        %v783 = vpack.c.b16 %v665, %v664
        %v784 = vpack.c.b16 %v667, %v666
        %v785 = vpack.c.b16 %v669, %v668
        %v786 = vpack.c.b16 %v671, %v670
        %v787 = vpack.c.b16 %v673, %v672
        %v788 = vpack.c.b16 %v675, %v674
        %v789 = vpack.c.b16 %v677, %v676
        %v790 = vpack.c.b16 %v679, %v678
        %v791 = vpack.c.b16 %v681, %v680
        %v792 = vpack.c.b16 %v683, %v682
        %v793 = vpack.c.b16 %v685, %v684
        %v794 = vpack.c.b16 %v687, %v686
        %v795 = vpack.c.b16 %v689, %v688
        %v796 = vpack.c.b16 %v691, %v690
        %v797 = vpack.c.b16 %v693, %v692
        %v798 = vpack.c.b16 %v695, %v694
        %v799 = vpack.c.b16 %v697, %v696
        %v800 = vpack.c.b16 %v699, %v698
        %v801 = vpack.c.b16 %v701, %v700
        %v802 = vpack.c.b16 %v703, %v702
        %v803 = vpack.c.b16 %v705, %v704
        %v804 = vpack.c.b16 %v707, %v706
        %v805 = vpack.c.b16 %v709, %v708
        %v806 = vpack.c.b16 %v711, %v710
        %v807 = vpack.c.b16 %v713, %v712
        %v808 = vpack.c.b16 %v715, %v714
        %v809 = vpack.c.b16 %v717, %v716
        %v810 = vpack.c.b16 %v719, %v718
        %v811 = vpack.c.b16 %v721, %v720
        %v812 = vpack.c.b16 %v723, %v722
        %v813 = vpack.c.b16 %v725, %v724
        %v814 = vpack.c.b16 %v727, %v726
        %v815 = vpack.c.b16 %v729, %v728
        %v816 = vpack.c.b16 %v731, %v730
        %v817 = vpack.c.b16 %v733, %v732
        %v818 = vpack.c.b16 %v735, %v734
        %v819 = vpack.c.b16 %v737, %v736
        %v820 = vpack.c.b16 %v739, %v738
        %v821 = vpack.c.b16 %v741, %v740
        %v822 = vpack.c.b16 %v743, %v742
        %v823 = vpack.c.b16 %v745, %v744
        %v824 = vpack.c.b16 %v747, %v746
        %v825 = vpack.c.b16 %v749, %v748
        %v826 = vpack.c.b16 %v751, %v750
        %v827 = vpack.c.b16 %v753, %v752
        %v828 = vpack.c.b16 %v755, %v754
        %v829 = vpack.c.b16 %v757, %v756
        %v830 = vpack.c.b16 %v759, %v758
        %v831 = vpack.c.b16 %v761, %v760
        %v832 = vpack.c.b16 %v763, %v762
        %v833 = vpack.c.b16 %v765, %v764
        %v834 = vpack.c.b16 %v767, %v766
        %v835 = vpack.c.b16 %v769, %v768
        %v836 = vpack.c.b16 %v771, %v770
        %v837 = vpack.c.b16 %v773, %v772
        %v918 = vunpack.c.l.b16 %v495
        %v919 = vunpack.c.l.b16 %v496
        %v920 = vunpack.c.l.b16 %v497
        %v921 = vunpack.c.l.b16 %v498
        %v922 = vunpack.c.l.b16 %v499
        %v923 = vunpack.c.l.b16 %v500
        %v924 = vunpack.c.l.b16 %v501
        %v925 = vunpack.c.l.b16 %v502
        %v926 = vunpack.c.l.b16 %v503
        %v927 = vunpack.c.l.b16 %v504
        %v928 = vunpack.c.l.b16 %v505
        %v929 = vunpack.c.l.b16 %v506
        %v930 = vunpack.c.l.b16 %v507
        %v931 = vunpack.c.l.b16 %v508
        %v932 = vunpack.c.l.b16 %v509
        %v933 = vunpack.c.l.b16 %v510
        %v934 = vpack.c.b16 %v919, %v918
        %v935 = vpack.c.b16 %v921, %v920
        %v936 = vpack.c.b16 %v923, %v922
        %v937 = vpack.c.b16 %v925, %v924
        %v938 = vpack.c.b16 %v927, %v926
        %v939 = vpack.c.b16 %v929, %v928
        %v940 = vpack.c.b16 %v931, %v930
        %v941 = vpack.c.b16 %v933, %v932
        %950 = vmatprep.subr.bf16.mxu0 0
        %951 = vmatpush1.bf16.msra.mxu0 %v934
        %952 = vmatprep.subr.bf16.mxu0 0
        %953 = vmatpush1.bf16.msra.mxu0 %v935
        %954 = vmatprep.subr.bf16.mxu0 0
        %955 = vmatpush1.bf16.msra.mxu0 %v936
        %956 = vmatprep.subr.bf16.mxu0 0
        %957 = vmatpush1.bf16.msra.mxu0 %v937
        %958 = vmatprep.subr.bf16.mxu0 0
        %959 = vmatpush1.bf16.msra.mxu0 %v938
        %960 = vmatprep.subr.bf16.mxu0 0
        %961 = vmatpush1.bf16.msra.mxu0 %v939
        %962 = vmatprep.subr.bf16.mxu0 0
        %963 = vmatpush1.bf16.msra.mxu0 %v940
        %964 = vmatprep.subr.bf16.mxu0 0
        %965 = vmatpush1.bf16.msra.mxu0 %v941
        %966 = vmatprep.subr.bf16.mxu0 0
        %967 = vmatpush1.bf16.msra.mxu0 0
        %968 = vmatprep.subr.bf16.mxu0 0
        %969 = vmatpush1.bf16.msra.mxu0 0
        %970 = vmatprep.subr.bf16.mxu0 0
        %971 = vmatpush1.bf16.msra.mxu0 0
        %972 = vmatprep.subr.bf16.mxu0 0
        %973 = vmatpush1.bf16.msra.mxu0 0
        %974 = vmatprep.subr.bf16.mxu0 0
        %975 = vmatpush1.bf16.msra.mxu0 0
        %976 = vmatprep.subr.bf16.mxu0 0
        %977 = vmatpush1.bf16.msra.mxu0 0
        %978 = vmatprep.subr.bf16.mxu0 0
        %979 = vmatpush1.bf16.msra.mxu0 0
        %980 = vmatprep.subr.bf16.mxu0 0
        %981 = vmatpush1.bf16.msra.mxu0 0
        %982 = vmatprep.mubr.bf16.mxu0 0
        %983 = vmatmul.mubr.bf16.gmra.mrb[0].mxu0 %v774
        %v984 = vpop.f32.mrb[0].mxu0
        %v985 = vadd.f32 %v516, %v984
        %v986 = vpop.f32.mrb[0].mxu0
        %v987 = vpop.f32.mrb[0].mxu0
        %v988 = vadd.f32 %v516, %v987
        %v989 = vpop.f32.mrb[0].mxu0
        %990 = vmatprep.mubr.bf16.mxu0 0
        %991 = vmatmul.mubr.bf16.gmra.mrb[0].mxu0 %v775
        %v992 = vpop.f32.mrb[0].mxu0
        %v993 = vadd.f32 %v516, %v992
        %v994 = vpop.f32.mrb[0].mxu0
        %v995 = vpop.f32.mrb[0].mxu0
        %v996 = vadd.f32 %v516, %v995
        %v997 = vpop.f32.mrb[0].mxu0
        %998 = vmatprep.mubr.bf16.mxu0 0
        %999 = vmatmul.mubr.bf16.gmra.mrb[0].mxu0 %v776
        %v1000 = vpop.f32.mrb[0].mxu0
        %v1001 = vadd.f32 %v516, %v1000
        %v1002 = vpop.f32.mrb[0].mxu0
        %v1003 = vpop.f32.mrb[0].mxu0
        %v1004 = vadd.f32 %v516, %v1003
        %v1005 = vpop.f32.mrb[0].mxu0
        %1006 = vmatprep.mubr.bf16.mxu0 0
        %1007 = vmatmul.mubr.bf16.gmra.mrb[0].mxu0 %v777
        %v1008 = vpop.f32.mrb[0].mxu0
        %v1009 = vadd.f32 %v516, %v1008
        %v1010 = vpop.f32.mrb[0].mxu0
        %v1011 = vpop.f32.mrb[0].mxu0
        %v1012 = vadd.f32 %v516, %v1011
        %v1013 = vpop.f32.mrb[0].mxu0
        %1014 = vmatprep.mubr.bf16.mxu0 0
        %1015 = vmatmul.mubr.bf16.gmra.mrb[0].mxu0 %v778
        %v1016 = vpop.f32.mrb[0].mxu0
        %v1017 = vadd.f32 %v516, %v1016
        %v1018 = vpop.f32.mrb[0].mxu0
        %v1019 = vpop.f32.mrb[0].mxu0
        %v1020 = vadd.f32 %v516, %v1019
        %v1021 = vpop.f32.mrb[0].mxu0
        %1022 = vmatprep.mubr.bf16.mxu0 0
        %1023 = vmatmul.mubr.bf16.gmra.mrb[0].mxu0 %v779
        %v1024 = vpop.f32.mrb[0].mxu0
        %v1025 = vadd.f32 %v516, %v1024
        %v1026 = vpop.f32.mrb[0].mxu0
        %v1027 = vpop.f32.mrb[0].mxu0
        %v1028 = vadd.f32 %v516, %v1027
        %v1029 = vpop.f32.mrb[0].mxu0
        %1030 = vmatprep.mubr.bf16.mxu0 0
        %1031 = vmatmul.mubr.bf16.gmra.mrb[0].mxu0 %v780
        %v1032 = vpop.f32.mrb[0].mxu0
        %v1033 = vadd.f32 %v516, %v1032
        %v1034 = vpop.f32.mrb[0].mxu0
        %v1035 = vpop.f32.mrb[0].mxu0
        %v1036 = vadd.f32 %v516, %v1035
        %v1037 = vpop.f32.mrb[0].mxu0
        %1038 = vmatprep.mubr.bf16.mxu0 0
        %1039 = vmatmul.mubr.bf16.gmra.mrb[0].mxu0 %v781
        %v1040 = vpop.f32.mrb[0].mxu0
        %v1041 = vadd.f32 %v516, %v1040
        %v1042 = vpop.f32.mrb[0].mxu0
        %v1043 = vpop.f32.mrb[0].mxu0
        %v1044 = vadd.f32 %v516, %v1043
        %v1045 = vpop.f32.mrb[0].mxu0
        %1046 = vmatprep.mubr.bf16.mxu0 0
        %1047 = vmatmul.mubr.bf16.gmra.mrb[0].mxu0 %v782
        %v1048 = vpop.f32.mrb[0].mxu0
        %v1049 = vadd.f32 %v516, %v1048
        %v1050 = vpop.f32.mrb[0].mxu0
        %v1051 = vpop.f32.mrb[0].mxu0
        %v1052 = vadd.f32 %v516, %v1051
        %v1053 = vpop.f32.mrb[0].mxu0
        %1054 = vmatprep.mubr.bf16.mxu0 0
        %1055 = vmatmul.mubr.bf16.gmra.mrb[0].mxu0 %v783
        %v1056 = vpop.f32.mrb[0].mxu0
        %v1057 = vadd.f32 %v516, %v1056
        %v1058 = vpop.f32.mrb[0].mxu0
        %v1059 = vpop.f32.mrb[0].mxu0
        %v1060 = vadd.f32 %v516, %v1059
        %v1061 = vpop.f32.mrb[0].mxu0
        %1062 = vmatprep.mubr.bf16.mxu0 0
        %1063 = vmatmul.mubr.bf16.gmra.mrb[0].mxu0 %v784
        %v1064 = vpop.f32.mrb[0].mxu0
        %v1065 = vadd.f32 %v516, %v1064
        %v1066 = vpop.f32.mrb[0].mxu0
        %v1067 = vpop.f32.mrb[0].mxu0
        %v1068 = vadd.f32 %v516, %v1067
        %v1069 = vpop.f32.mrb[0].mxu0
        %1070 = vmatprep.mubr.bf16.mxu0 0
        %1071 = vmatmul.mubr.bf16.gmra.mrb[0].mxu0 %v785
        %v1072 = vpop.f32.mrb[0].mxu0
        %v1073 = vadd.f32 %v516, %v1072
        %v1074 = vpop.f32.mrb[0].mxu0
        %v1075 = vpop.f32.mrb[0].mxu0
        %v1076 = vadd.f32 %v516, %v1075
        %v1077 = vpop.f32.mrb[0].mxu0
        %1078 = vmatprep.mubr.bf16.mxu0 0
        %1079 = vmatmul.mubr.bf16.gmra.mrb[0].mxu0 %v786
        %v1080 = vpop.f32.mrb[0].mxu0
        %v1081 = vadd.f32 %v516, %v1080
        %v1082 = vpop.f32.mrb[0].mxu0
        %v1083 = vpop.f32.mrb[0].mxu0
        %v1084 = vadd.f32 %v516, %v1083
        %v1085 = vpop.f32.mrb[0].mxu0
        %1086 = vmatprep.mubr.bf16.mxu0 0
        %1087 = vmatmul.mubr.bf16.gmra.mrb[0].mxu0 %v787
        %v1088 = vpop.f32.mrb[0].mxu0
        %v1089 = vadd.f32 %v516, %v1088
        %v1090 = vpop.f32.mrb[0].mxu0
        %v1091 = vpop.f32.mrb[0].mxu0
        %v1092 = vadd.f32 %v516, %v1091
        %v1093 = vpop.f32.mrb[0].mxu0
        %1094 = vmatprep.mubr.bf16.mxu0 0
        %1095 = vmatmul.mubr.bf16.gmra.mrb[0].mxu0 %v788
        %v1096 = vpop.f32.mrb[0].mxu0
        %v1097 = vadd.f32 %v516, %v1096
        %v1098 = vpop.f32.mrb[0].mxu0
        %v1099 = vpop.f32.mrb[0].mxu0
        %v1100 = vadd.f32 %v516, %v1099
        %v1101 = vpop.f32.mrb[0].mxu0
        %1102 = vmatprep.mubr.bf16.mxu0 0
        %1103 = vmatmul.mubr.bf16.gmra.mrb[0].mxu0 %v789
        %v1104 = vpop.f32.mrb[0].mxu0
        %v1105 = vadd.f32 %v516, %v1104
        %v1106 = vpop.f32.mrb[0].mxu0
        %v1107 = vpop.f32.mrb[0].mxu0
        %v1108 = vadd.f32 %v516, %v1107
        %v1109 = vpop.f32.mrb[0].mxu0
        %1110 = vmatprep.mubr.bf16.mxu0 0
        %1111 = vmatmul.mubr.bf16.gmra.mrb[0].mxu0 %v790
        %v1112 = vpop.f32.mrb[0].mxu0
        %v1113 = vadd.f32 %v516, %v1112
        %v1114 = vpop.f32.mrb[0].mxu0
        %v1115 = vpop.f32.mrb[0].mxu0
        %v1116 = vadd.f32 %v516, %v1115
        %v1117 = vpop.f32.mrb[0].mxu0
        %1118 = vmatprep.mubr.bf16.mxu0 0
        %1119 = vmatmul.mubr.bf16.gmra.mrb[0].mxu0 %v791
        %v1120 = vpop.f32.mrb[0].mxu0
        %v1121 = vadd.f32 %v516, %v1120
        %v1122 = vpop.f32.mrb[0].mxu0
        %v1123 = vpop.f32.mrb[0].mxu0
        %v1124 = vadd.f32 %v516, %v1123
        %v1125 = vpop.f32.mrb[0].mxu0
        %1126 = vmatprep.mubr.bf16.mxu0 0
        %1127 = vmatmul.mubr.bf16.gmra.mrb[0].mxu0 %v792
        %v1128 = vpop.f32.mrb[0].mxu0
        %v1129 = vadd.f32 %v516, %v1128
        %v1130 = vpop.f32.mrb[0].mxu0
        %v1131 = vpop.f32.mrb[0].mxu0
        %v1132 = vadd.f32 %v516, %v1131
        %v1133 = vpop.f32.mrb[0].mxu0
        %1134 = vmatprep.mubr.bf16.mxu0 0
        %1135 = vmatmul.mubr.bf16.gmra.mrb[0].mxu0 %v793
        %v1136 = vpop.f32.mrb[0].mxu0
        %v1137 = vadd.f32 %v516, %v1136
        %v1138 = vpop.f32.mrb[0].mxu0
        %v1139 = vpop.f32.mrb[0].mxu0
        %v1140 = vadd.f32 %v516, %v1139
        %v1141 = vpop.f32.mrb[0].mxu0
        %1142 = vmatprep.mubr.bf16.mxu0 0
        %1143 = vmatmul.mubr.bf16.gmra.mrb[0].mxu0 %v794
        %v1144 = vpop.f32.mrb[0].mxu0
        %v1145 = vadd.f32 %v516, %v1144
        %v1146 = vpop.f32.mrb[0].mxu0
        %v1147 = vpop.f32.mrb[0].mxu0
        %v1148 = vadd.f32 %v516, %v1147
        %v1149 = vpop.f32.mrb[0].mxu0
        %1150 = vmatprep.mubr.bf16.mxu0 0
        %1151 = vmatmul.mubr.bf16.gmra.mrb[0].mxu0 %v795
        %v1152 = vpop.f32.mrb[0].mxu0
        %v1153 = vadd.f32 %v516, %v1152
        %v1154 = vpop.f32.mrb[0].mxu0
        %v1155 = vpop.f32.mrb[0].mxu0
        %v1156 = vadd.f32 %v516, %v1155
        %v1157 = vpop.f32.mrb[0].mxu0
        %1158 = vmatprep.mubr.bf16.mxu0 0
        %1159 = vmatmul.mubr.bf16.gmra.mrb[0].mxu0 %v796
        %v1160 = vpop.f32.mrb[0].mxu0
        %v1161 = vadd.f32 %v516, %v1160
        %v1162 = vpop.f32.mrb[0].mxu0
        %v1163 = vpop.f32.mrb[0].mxu0
        %v1164 = vadd.f32 %v516, %v1163
        %v1165 = vpop.f32.mrb[0].mxu0
        %1166 = vmatprep.mubr.bf16.mxu0 0
        %1167 = vmatmul.mubr.bf16.gmra.mrb[0].mxu0 %v797
        %v1168 = vpop.f32.mrb[0].mxu0
        %v1169 = vadd.f32 %v516, %v1168
        %v1170 = vpop.f32.mrb[0].mxu0
        %v1171 = vpop.f32.mrb[0].mxu0
        %v1172 = vadd.f32 %v516, %v1171
        %v1173 = vpop.f32.mrb[0].mxu0
        %1174 = vmatprep.mubr.bf16.mxu0 0
        %1175 = vmatmul.mubr.bf16.gmra.mrb[0].mxu0 %v798
        %v1176 = vpop.f32.mrb[0].mxu0
        %v1177 = vadd.f32 %v516, %v1176
        %v1178 = vpop.f32.mrb[0].mxu0
        %v1179 = vpop.f32.mrb[0].mxu0
        %v1180 = vadd.f32 %v516, %v1179
        %v1181 = vpop.f32.mrb[0].mxu0
        %1182 = vmatprep.mubr.bf16.mxu0 0
        %1183 = vmatmul.mubr.bf16.gmra.mrb[0].mxu0 %v799
        %v1184 = vpop.f32.mrb[0].mxu0
        %v1185 = vadd.f32 %v516, %v1184
        %v1186 = vpop.f32.mrb[0].mxu0
        %v1187 = vpop.f32.mrb[0].mxu0
        %v1188 = vadd.f32 %v516, %v1187
        %v1189 = vpop.f32.mrb[0].mxu0
        %1190 = vmatprep.mubr.bf16.mxu0 0
        %1191 = vmatmul.mubr.bf16.gmra.mrb[0].mxu0 %v800
        %v1192 = vpop.f32.mrb[0].mxu0
        %v1193 = vadd.f32 %v516, %v1192
        %v1194 = vpop.f32.mrb[0].mxu0
        %v1195 = vpop.f32.mrb[0].mxu0
        %v1196 = vadd.f32 %v516, %v1195
        %v1197 = vpop.f32.mrb[0].mxu0
        %1198 = vmatprep.mubr.bf16.mxu0 0
        %1199 = vmatmul.mubr.bf16.gmra.mrb[0].mxu0 %v801
        %v1200 = vpop.f32.mrb[0].mxu0
        %v1201 = vadd.f32 %v516, %v1200
        %v1202 = vpop.f32.mrb[0].mxu0
        %v1203 = vpop.f32.mrb[0].mxu0
        %v1204 = vadd.f32 %v516, %v1203
        %v1205 = vpop.f32.mrb[0].mxu0
        %1206 = vmatprep.mubr.bf16.mxu0 0
        %1207 = vmatmul.mubr.bf16.gmra.mrb[0].mxu0 %v802
        %v1208 = vpop.f32.mrb[0].mxu0
        %v1209 = vadd.f32 %v516, %v1208
        %v1210 = vpop.f32.mrb[0].mxu0
        %v1211 = vpop.f32.mrb[0].mxu0
        %v1212 = vadd.f32 %v516, %v1211
        %v1213 = vpop.f32.mrb[0].mxu0
        %1214 = vmatprep.mubr.bf16.mxu0 0
        %1215 = vmatmul.mubr.bf16.gmra.mrb[0].mxu0 %v803
        %v1216 = vpop.f32.mrb[0].mxu0
        %v1217 = vadd.f32 %v516, %v1216
        %v1218 = vpop.f32.mrb[0].mxu0
        %v1219 = vpop.f32.mrb[0].mxu0
        %v1220 = vadd.f32 %v516, %v1219
        %v1221 = vpop.f32.mrb[0].mxu0
        %1222 = vmatprep.mubr.bf16.mxu0 0
        %1223 = vmatmul.mubr.bf16.gmra.mrb[0].mxu0 %v804
        %v1224 = vpop.f32.mrb[0].mxu0
        %v1225 = vadd.f32 %v516, %v1224
        %v1226 = vpop.f32.mrb[0].mxu0
        %v1227 = vpop.f32.mrb[0].mxu0
        %v1228 = vadd.f32 %v516, %v1227
        %v1229 = vpop.f32.mrb[0].mxu0
        %1230 = vmatprep.mubr.bf16.mxu0 0
        %1231 = vmatmul.mubr.bf16.gmra.mrb[0].mxu0 %v805
        %v1232 = vpop.f32.mrb[0].mxu0
        %v1233 = vadd.f32 %v516, %v1232
        %v1234 = vpop.f32.mrb[0].mxu0
        %v1235 = vpop.f32.mrb[0].mxu0
        %v1236 = vadd.f32 %v516, %v1235
        %v1237 = vpop.f32.mrb[0].mxu0
        %1238 = vmatprep.mubr.bf16.mxu0 0
        %1239 = vmatmul.mubr.bf16.gmra.mrb[0].mxu0 %v806
        %v1240 = vpop.f32.mrb[0].mxu0
        %v1241 = vadd.f32 %v516, %v1240
        %v1242 = vpop.f32.mrb[0].mxu0
        %v1243 = vpop.f32.mrb[0].mxu0
        %v1244 = vadd.f32 %v516, %v1243
        %v1245 = vpop.f32.mrb[0].mxu0
        %1246 = vmatprep.mubr.bf16.mxu0 0
        %1247 = vmatmul.mubr.bf16.gmra.mrb[0].mxu0 %v807
        %v1248 = vpop.f32.mrb[0].mxu0
        %v1249 = vadd.f32 %v516, %v1248
        %v1250 = vpop.f32.mrb[0].mxu0
        %v1251 = vpop.f32.mrb[0].mxu0
        %v1252 = vadd.f32 %v516, %v1251
        %v1253 = vpop.f32.mrb[0].mxu0
        %1254 = vmatprep.mubr.bf16.mxu0 0
        %1255 = vmatmul.mubr.bf16.gmra.mrb[0].mxu0 %v808
        %v1256 = vpop.f32.mrb[0].mxu0
        %v1257 = vadd.f32 %v516, %v1256
        %v1258 = vpop.f32.mrb[0].mxu0
        %v1259 = vpop.f32.mrb[0].mxu0
        %v1260 = vadd.f32 %v516, %v1259
        %v1261 = vpop.f32.mrb[0].mxu0
        %1262 = vmatprep.mubr.bf16.mxu0 0
        %1263 = vmatmul.mubr.bf16.gmra.mrb[0].mxu0 %v809
        %v1264 = vpop.f32.mrb[0].mxu0
        %v1265 = vadd.f32 %v516, %v1264
        %v1266 = vpop.f32.mrb[0].mxu0
        %v1267 = vpop.f32.mrb[0].mxu0
        %v1268 = vadd.f32 %v516, %v1267
        %v1269 = vpop.f32.mrb[0].mxu0
        %1270 = vmatprep.mubr.bf16.mxu0 0
        %1271 = vmatmul.mubr.bf16.gmra.mrb[0].mxu0 %v810
        %v1272 = vpop.f32.mrb[0].mxu0
        %v1273 = vadd.f32 %v516, %v1272
        %v1274 = vpop.f32.mrb[0].mxu0
        %v1275 = vpop.f32.mrb[0].mxu0
        %v1276 = vadd.f32 %v516, %v1275
        %v1277 = vpop.f32.mrb[0].mxu0
        %1278 = vmatprep.mubr.bf16.mxu0 0
        %1279 = vmatmul.mubr.bf16.gmra.mrb[0].mxu0 %v811
        %v1280 = vpop.f32.mrb[0].mxu0
        %v1281 = vadd.f32 %v516, %v1280
        %v1282 = vpop.f32.mrb[0].mxu0
        %v1283 = vpop.f32.mrb[0].mxu0
        %v1284 = vadd.f32 %v516, %v1283
        %v1285 = vpop.f32.mrb[0].mxu0
        %1286 = vmatprep.mubr.bf16.mxu0 0
        %1287 = vmatmul.mubr.bf16.gmra.mrb[0].mxu0 %v812
        %v1288 = vpop.f32.mrb[0].mxu0
        %v1289 = vadd.f32 %v516, %v1288
        %v1290 = vpop.f32.mrb[0].mxu0
        %v1291 = vpop.f32.mrb[0].mxu0
        %v1292 = vadd.f32 %v516, %v1291
        %v1293 = vpop.f32.mrb[0].mxu0
        %1294 = vmatprep.mubr.bf16.mxu0 0
        %1295 = vmatmul.mubr.bf16.gmra.mrb[0].mxu0 %v813
        %v1296 = vpop.f32.mrb[0].mxu0
        %v1297 = vadd.f32 %v516, %v1296
        %v1298 = vpop.f32.mrb[0].mxu0
        %v1299 = vpop.f32.mrb[0].mxu0
        %v1300 = vadd.f32 %v516, %v1299
        %v1301 = vpop.f32.mrb[0].mxu0
        %1302 = vmatprep.mubr.bf16.mxu0 0
        %1303 = vmatmul.mubr.bf16.gmra.mrb[0].mxu0 %v814
        %v1304 = vpop.f32.mrb[0].mxu0
        %v1305 = vadd.f32 %v516, %v1304
        %v1306 = vpop.f32.mrb[0].mxu0
        %v1307 = vpop.f32.mrb[0].mxu0
        %v1308 = vadd.f32 %v516, %v1307
        %v1309 = vpop.f32.mrb[0].mxu0
        %1310 = vmatprep.mubr.bf16.mxu0 0
        %1311 = vmatmul.mubr.bf16.gmra.mrb[0].mxu0 %v815
        %v1312 = vpop.f32.mrb[0].mxu0
        %v1313 = vadd.f32 %v516, %v1312
        %v1314 = vpop.f32.mrb[0].mxu0
        %v1315 = vpop.f32.mrb[0].mxu0
        %v1316 = vadd.f32 %v516, %v1315
        %v1317 = vpop.f32.mrb[0].mxu0
        %1318 = vmatprep.mubr.bf16.mxu0 0
        %1319 = vmatmul.mubr.bf16.gmra.mrb[0].mxu0 %v816
        %v1320 = vpop.f32.mrb[0].mxu0
        %v1321 = vadd.f32 %v516, %v1320
        %v1322 = vpop.f32.mrb[0].mxu0
        %v1323 = vpop.f32.mrb[0].mxu0
        %v1324 = vadd.f32 %v516, %v1323
        %v1325 = vpop.f32.mrb[0].mxu0
        %1326 = vmatprep.mubr.bf16.mxu0 0
        %1327 = vmatmul.mubr.bf16.gmra.mrb[0].mxu0 %v817
        %v1328 = vpop.f32.mrb[0].mxu0
        %v1329 = vadd.f32 %v516, %v1328
        %v1330 = vpop.f32.mrb[0].mxu0
        %v1331 = vpop.f32.mrb[0].mxu0
        %v1332 = vadd.f32 %v516, %v1331
        %v1333 = vpop.f32.mrb[0].mxu0
        %1334 = vmatprep.mubr.bf16.mxu0 0
        %1335 = vmatmul.mubr.bf16.gmra.mrb[0].mxu0 %v818
        %v1336 = vpop.f32.mrb[0].mxu0
        %v1337 = vadd.f32 %v516, %v1336
        %v1338 = vpop.f32.mrb[0].mxu0
        %v1339 = vpop.f32.mrb[0].mxu0
        %v1340 = vadd.f32 %v516, %v1339
        %v1341 = vpop.f32.mrb[0].mxu0
        %1342 = vmatprep.mubr.bf16.mxu0 0
        %1343 = vmatmul.mubr.bf16.gmra.mrb[0].mxu0 %v819
        %v1344 = vpop.f32.mrb[0].mxu0
        %v1345 = vadd.f32 %v516, %v1344
        %v1346 = vpop.f32.mrb[0].mxu0
        %v1347 = vpop.f32.mrb[0].mxu0
        %v1348 = vadd.f32 %v516, %v1347
        %v1349 = vpop.f32.mrb[0].mxu0
        %1350 = vmatprep.mubr.bf16.mxu0 0
        %1351 = vmatmul.mubr.bf16.gmra.mrb[0].mxu0 %v820
        %v1352 = vpop.f32.mrb[0].mxu0
        %v1353 = vadd.f32 %v516, %v1352
        %v1354 = vpop.f32.mrb[0].mxu0
        %v1355 = vpop.f32.mrb[0].mxu0
        %v1356 = vadd.f32 %v516, %v1355
        %v1357 = vpop.f32.mrb[0].mxu0
        %1358 = vmatprep.mubr.bf16.mxu0 0
        %1359 = vmatmul.mubr.bf16.gmra.mrb[0].mxu0 %v821
        %v1360 = vpop.f32.mrb[0].mxu0
        %v1361 = vadd.f32 %v516, %v1360
        %v1362 = vpop.f32.mrb[0].mxu0
        %v1363 = vpop.f32.mrb[0].mxu0
        %v1364 = vadd.f32 %v516, %v1363
        %v1365 = vpop.f32.mrb[0].mxu0
        %1366 = vmatprep.mubr.bf16.mxu0 0
        %1367 = vmatmul.mubr.bf16.gmra.mrb[0].mxu0 %v822
        %v1368 = vpop.f32.mrb[0].mxu0
        %v1369 = vadd.f32 %v516, %v1368
        %v1370 = vpop.f32.mrb[0].mxu0
        %v1371 = vpop.f32.mrb[0].mxu0
        %v1372 = vadd.f32 %v516, %v1371
        %v1373 = vpop.f32.mrb[0].mxu0
        %1374 = vmatprep.mubr.bf16.mxu0 0
        %1375 = vmatmul.mubr.bf16.gmra.mrb[0].mxu0 %v823
        %v1376 = vpop.f32.mrb[0].mxu0
        %v1377 = vadd.f32 %v516, %v1376
        %v1378 = vpop.f32.mrb[0].mxu0
        %v1379 = vpop.f32.mrb[0].mxu0
        %v1380 = vadd.f32 %v516, %v1379
        %v1381 = vpop.f32.mrb[0].mxu0
        %1382 = vmatprep.mubr.bf16.mxu0 0
        %1383 = vmatmul.mubr.bf16.gmra.mrb[0].mxu0 %v824
        %v1384 = vpop.f32.mrb[0].mxu0
        %v1385 = vadd.f32 %v516, %v1384
        %v1386 = vpop.f32.mrb[0].mxu0
        %v1387 = vpop.f32.mrb[0].mxu0
        %v1388 = vadd.f32 %v516, %v1387
        %v1389 = vpop.f32.mrb[0].mxu0
        %1390 = vmatprep.mubr.bf16.mxu0 0
        %1391 = vmatmul.mubr.bf16.gmra.mrb[0].mxu0 %v825
        %v1392 = vpop.f32.mrb[0].mxu0
        %v1393 = vadd.f32 %v516, %v1392
        %v1394 = vpop.f32.mrb[0].mxu0
        %v1395 = vpop.f32.mrb[0].mxu0
        %v1396 = vadd.f32 %v516, %v1395
        %v1397 = vpop.f32.mrb[0].mxu0
        %1398 = vmatprep.mubr.bf16.mxu0 0
        %1399 = vmatmul.mubr.bf16.gmra.mrb[0].mxu0 %v826
        %v1400 = vpop.f32.mrb[0].mxu0
        %v1401 = vadd.f32 %v516, %v1400
        %v1402 = vpop.f32.mrb[0].mxu0
        %v1403 = vpop.f32.mrb[0].mxu0
        %v1404 = vadd.f32 %v516, %v1403
        %v1405 = vpop.f32.mrb[0].mxu0
        %1406 = vmatprep.mubr.bf16.mxu0 0
        %1407 = vmatmul.mubr.bf16.gmra.mrb[0].mxu0 %v827
        %v1408 = vpop.f32.mrb[0].mxu0
        %v1409 = vadd.f32 %v516, %v1408
        %v1410 = vpop.f32.mrb[0].mxu0
        %v1411 = vpop.f32.mrb[0].mxu0
        %v1412 = vadd.f32 %v516, %v1411
        %v1413 = vpop.f32.mrb[0].mxu0
        %1414 = vmatprep.mubr.bf16.mxu0 0
        %1415 = vmatmul.mubr.bf16.gmra.mrb[0].mxu0 %v828
        %v1416 = vpop.f32.mrb[0].mxu0
        %v1417 = vadd.f32 %v516, %v1416
        %v1418 = vpop.f32.mrb[0].mxu0
        %v1419 = vpop.f32.mrb[0].mxu0
        %v1420 = vadd.f32 %v516, %v1419
        %v1421 = vpop.f32.mrb[0].mxu0
        %1422 = vmatprep.mubr.bf16.mxu0 0
        %1423 = vmatmul.mubr.bf16.gmra.mrb[0].mxu0 %v829
        %v1424 = vpop.f32.mrb[0].mxu0
        %v1425 = vadd.f32 %v516, %v1424
        %v1426 = vpop.f32.mrb[0].mxu0
        %v1427 = vpop.f32.mrb[0].mxu0
        %v1428 = vadd.f32 %v516, %v1427
        %v1429 = vpop.f32.mrb[0].mxu0
        %1430 = vmatprep.mubr.bf16.mxu0 0
        %1431 = vmatmul.mubr.bf16.gmra.mrb[0].mxu0 %v830
        %v1432 = vpop.f32.mrb[0].mxu0
        %v1433 = vadd.f32 %v516, %v1432
        %v1434 = vpop.f32.mrb[0].mxu0
        %v1435 = vpop.f32.mrb[0].mxu0
        %v1436 = vadd.f32 %v516, %v1435
        %v1437 = vpop.f32.mrb[0].mxu0
        %1438 = vmatprep.mubr.bf16.mxu0 0
        %1439 = vmatmul.mubr.bf16.gmra.mrb[0].mxu0 %v831
        %v1440 = vpop.f32.mrb[0].mxu0
        %v1441 = vadd.f32 %v516, %v1440
        %v1442 = vpop.f32.mrb[0].mxu0
        %v1443 = vpop.f32.mrb[0].mxu0
        %v1444 = vadd.f32 %v516, %v1443
        %v1445 = vpop.f32.mrb[0].mxu0
        %1446 = vmatprep.mubr.bf16.mxu0 0
        %1447 = vmatmul.mubr.bf16.gmra.mrb[0].mxu0 %v832
        %v1448 = vpop.f32.mrb[0].mxu0
        %v1449 = vadd.f32 %v516, %v1448
        %v1450 = vpop.f32.mrb[0].mxu0
        %v1451 = vpop.f32.mrb[0].mxu0
        %v1452 = vadd.f32 %v516, %v1451
        %v1453 = vpop.f32.mrb[0].mxu0
        %1454 = vmatprep.mubr.bf16.mxu0 0
        %1455 = vmatmul.mubr.bf16.gmra.mrb[0].mxu0 %v833
        %v1456 = vpop.f32.mrb[0].mxu0
        %v1457 = vadd.f32 %v516, %v1456
        %v1458 = vpop.f32.mrb[0].mxu0
        %v1459 = vpop.f32.mrb[0].mxu0
        %v1460 = vadd.f32 %v516, %v1459
        %v1461 = vpop.f32.mrb[0].mxu0
        %1462 = vmatprep.mubr.bf16.mxu0 0
        %1463 = vmatmul.mubr.bf16.gmra.mrb[0].mxu0 %v834
        %v1464 = vpop.f32.mrb[0].mxu0
        %v1465 = vadd.f32 %v516, %v1464
        %v1466 = vpop.f32.mrb[0].mxu0
        %v1467 = vpop.f32.mrb[0].mxu0
        %v1468 = vadd.f32 %v516, %v1467
        %v1469 = vpop.f32.mrb[0].mxu0
        %1470 = vmatprep.mubr.bf16.mxu0 0
        %1471 = vmatmul.mubr.bf16.gmra.mrb[0].mxu0 %v835
        %v1472 = vpop.f32.mrb[0].mxu0
        %v1473 = vadd.f32 %v516, %v1472
        %v1474 = vpop.f32.mrb[0].mxu0
        %v1475 = vpop.f32.mrb[0].mxu0
        %v1476 = vadd.f32 %v516, %v1475
        %v1477 = vpop.f32.mrb[0].mxu0
        %1478 = vmatprep.mubr.bf16.mxu0 0
        %1479 = vmatmul.mubr.bf16.gmra.mrb[0].mxu0 %v836
        %v1480 = vpop.f32.mrb[0].mxu0
        %v1481 = vadd.f32 %v516, %v1480
        %v1482 = vpop.f32.mrb[0].mxu0
        %v1483 = vpop.f32.mrb[0].mxu0
        %v1484 = vadd.f32 %v516, %v1483
        %v1485 = vpop.f32.mrb[0].mxu0
        %1486 = vmatprep.mubr.bf16.mxu0 0
        %1487 = vmatmul.mubr.bf16.gmra.mrb[0].mxu0 %v837
        %v1488 = vpop.f32.mrb[0].mxu0
        %v1489 = vadd.f32 %v516, %v1488
        %v1490 = vpop.f32.mrb[0].mxu0
        %v1491 = vpop.f32.mrb[0].mxu0
        %v1492 = vadd.f32 %v516, %v1491
        %v1493 = vpop.f32.mrb[0].mxu0
        %1494 = vdwg.mxu0
        %v1495 = vmax.f32 %v985, 0.0
        %v1496 = vmax.f32 %v988, 0.0
        %v1497 = vmax.f32 %v993, 0.0
        %v1498 = vmax.f32 %v996, 0.0
        %v1499 = vmax.f32 %v1001, 0.0
        %v1500 = vmax.f32 %v1004, 0.0
        %v1501 = vmax.f32 %v1009, 0.0
        %v1502 = vmax.f32 %v1012, 0.0
        %v1503 = vmax.f32 %v1017, 0.0
        %v1504 = vmax.f32 %v1020, 0.0
        %v1505 = vmax.f32 %v1025, 0.0
        %v1506 = vmax.f32 %v1028, 0.0
        %v1507 = vmax.f32 %v1033, 0.0
        %v1508 = vmax.f32 %v1036, 0.0
        %v1509 = vmax.f32 %v1041, 0.0
        %v1510 = vmax.f32 %v1044, 0.0
        %v1511 = vmax.f32 %v1049, 0.0
        %v1512 = vmax.f32 %v1052, 0.0
        %v1513 = vmax.f32 %v1057, 0.0
        %v1514 = vmax.f32 %v1060, 0.0
        %v1515 = vmax.f32 %v1065, 0.0
        %v1516 = vmax.f32 %v1068, 0.0
        %v1517 = vmax.f32 %v1073, 0.0
        %v1518 = vmax.f32 %v1076, 0.0
        %v1519 = vmax.f32 %v1081, 0.0
        %v1520 = vmax.f32 %v1084, 0.0
        %v1521 = vmax.f32 %v1089, 0.0
        %v1522 = vmax.f32 %v1092, 0.0
        %v1523 = vmax.f32 %v1097, 0.0
        %v1524 = vmax.f32 %v1100, 0.0
        %v1525 = vmax.f32 %v1105, 0.0
        %v1526 = vmax.f32 %v1108, 0.0
        %v1527 = vmax.f32 %v1113, 0.0
        %v1528 = vmax.f32 %v1116, 0.0
        %v1529 = vmax.f32 %v1121, 0.0
        %v1530 = vmax.f32 %v1124, 0.0
        %v1531 = vmax.f32 %v1129, 0.0
        %v1532 = vmax.f32 %v1132, 0.0
        %v1533 = vmax.f32 %v1137, 0.0
        %v1534 = vmax.f32 %v1140, 0.0
        %v1535 = vmax.f32 %v1145, 0.0
        %v1536 = vmax.f32 %v1148, 0.0
        %v1537 = vmax.f32 %v1153, 0.0
        %v1538 = vmax.f32 %v1156, 0.0
        %v1539 = vmax.f32 %v1161, 0.0
        %v1540 = vmax.f32 %v1164, 0.0
        %v1541 = vmax.f32 %v1169, 0.0
        %v1542 = vmax.f32 %v1172, 0.0
        %v1543 = vmax.f32 %v1177, 0.0
        %v1544 = vmax.f32 %v1180, 0.0
        %v1545 = vmax.f32 %v1185, 0.0
        %v1546 = vmax.f32 %v1188, 0.0
        %v1547 = vmax.f32 %v1193, 0.0
        %v1548 = vmax.f32 %v1196, 0.0
        %v1549 = vmax.f32 %v1201, 0.0
        %v1550 = vmax.f32 %v1204, 0.0
        %v1551 = vmax.f32 %v1209, 0.0
        %v1552 = vmax.f32 %v1212, 0.0
        %v1553 = vmax.f32 %v1217, 0.0
        %v1554 = vmax.f32 %v1220, 0.0
        %v1555 = vmax.f32 %v1225, 0.0
        %v1556 = vmax.f32 %v1228, 0.0
        %v1557 = vmax.f32 %v1233, 0.0
        %v1558 = vmax.f32 %v1236, 0.0
        %v1559 = vmax.f32 %v1241, 0.0
        %v1560 = vmax.f32 %v1244, 0.0
        %v1561 = vmax.f32 %v1249, 0.0
        %v1562 = vmax.f32 %v1252, 0.0
        %v1563 = vmax.f32 %v1257, 0.0
        %v1564 = vmax.f32 %v1260, 0.0
        %v1565 = vmax.f32 %v1265, 0.0
        %v1566 = vmax.f32 %v1268, 0.0
        %v1567 = vmax.f32 %v1273, 0.0
        %v1568 = vmax.f32 %v1276, 0.0
        %v1569 = vmax.f32 %v1281, 0.0
        %v1570 = vmax.f32 %v1284, 0.0
        %v1571 = vmax.f32 %v1289, 0.0
        %v1572 = vmax.f32 %v1292, 0.0
        %v1573 = vmax.f32 %v1297, 0.0
        %v1574 = vmax.f32 %v1300, 0.0
        %v1575 = vmax.f32 %v1305, 0.0
        %v1576 = vmax.f32 %v1308, 0.0
        %v1577 = vmax.f32 %v1313, 0.0
        %v1578 = vmax.f32 %v1316, 0.0
        %v1579 = vmax.f32 %v1321, 0.0
        %v1580 = vmax.f32 %v1324, 0.0
        %v1581 = vmax.f32 %v1329, 0.0
        %v1582 = vmax.f32 %v1332, 0.0
        %v1583 = vmax.f32 %v1337, 0.0
        %v1584 = vmax.f32 %v1340, 0.0
        %v1585 = vmax.f32 %v1345, 0.0
        %v1586 = vmax.f32 %v1348, 0.0
        %v1587 = vmax.f32 %v1353, 0.0
        %v1588 = vmax.f32 %v1356, 0.0
        %v1589 = vmax.f32 %v1361, 0.0
        %v1590 = vmax.f32 %v1364, 0.0
        %v1591 = vmax.f32 %v1369, 0.0
        %v1592 = vmax.f32 %v1372, 0.0
        %v1593 = vmax.f32 %v1377, 0.0
        %v1594 = vmax.f32 %v1380, 0.0
        %v1595 = vmax.f32 %v1385, 0.0
        %v1596 = vmax.f32 %v1388, 0.0
        %v1597 = vmax.f32 %v1393, 0.0
        %v1598 = vmax.f32 %v1396, 0.0
        %v1599 = vmax.f32 %v1401, 0.0
        %v1600 = vmax.f32 %v1404, 0.0
        %v1601 = vmax.f32 %v1409, 0.0
        %v1602 = vmax.f32 %v1412, 0.0
        %v1603 = vmax.f32 %v1417, 0.0
        %v1604 = vmax.f32 %v1420, 0.0
        %v1605 = vmax.f32 %v1425, 0.0
        %v1606 = vmax.f32 %v1428, 0.0
        %v1607 = vmax.f32 %v1433, 0.0
        %v1608 = vmax.f32 %v1436, 0.0
        %v1609 = vmax.f32 %v1441, 0.0
        %v1610 = vmax.f32 %v1444, 0.0
        %v1611 = vmax.f32 %v1449, 0.0
        %v1612 = vmax.f32 %v1452, 0.0
        %v1613 = vmax.f32 %v1457, 0.0
        %v1614 = vmax.f32 %v1460, 0.0
        %v1615 = vmax.f32 %v1465, 0.0
        %v1616 = vmax.f32 %v1468, 0.0
        %v1617 = vmax.f32 %v1473, 0.0
        %v1618 = vmax.f32 %v1476, 0.0
        %v1619 = vmax.f32 %v1481, 0.0
        %v1620 = vmax.f32 %v1484, 0.0
        %v1621 = vmax.f32 %v1489, 0.0
        %v1622 = vmax.f32 %v1492, 0.0
        %v1623 = vld [vmem:[%s304] sm:$0xff]
        %v1624 = vlaneseq
        %v1625 = vshrl.u32 %v1624, 7
        %v1626 = vlaneseq
        %v1627 = vshrl.u32 %v1626, 7
        %v1628 = vsub.s32 0, %v1627
        %v1629 = vrot.slane %v1623, %v1628
        %v1630 = vlaneseq
        %v1631 = vshrl.u32 %v1630, 7
        %v1632 = vsub.s32 1, %v1631
        %v1633 = vrot.slane %v1623, %v1632
        %v1634 = vlaneseq
        %v1635 = vshrl.u32 %v1634, 7
        %v1636 = vsub.s32 2, %v1635
        %v1637 = vrot.slane %v1623, %v1636
        %v1638 = vlaneseq
        %v1639 = vshrl.u32 %v1638, 7
        %v1640 = vsub.s32 3, %v1639
        %v1641 = vrot.slane %v1623, %v1640
        %v1642 = vlaneseq
        %v1643 = vshrl.u32 %v1642, 7
        %v1644 = vsub.s32 4, %v1643
        %v1645 = vrot.slane %v1623, %v1644
        %v1646 = vlaneseq
        %v1647 = vshrl.u32 %v1646, 7
        %v1648 = vsub.s32 5, %v1647
        %v1649 = vrot.slane %v1623, %v1648
        %v1650 = vlaneseq
        %v1651 = vshrl.u32 %v1650, 7
        %v1652 = vsub.s32 6, %v1651
        %v1653 = vrot.slane %v1623, %v1652
        %v1654 = vlaneseq
        %v1655 = vshrl.u32 %v1654, 7
        %v1656 = vsub.s32 7, %v1655
        %v1657 = vrot.slane %v1623, %v1656
        %vm1658 = vcmp.eq.s32.totalorder %v1625, %v1629
        %vm1659 = vcmp.eq.s32.totalorder %v1625, %v1633
        %vm1660 = vcmp.eq.s32.totalorder %v1625, %v1637
        %vm1661 = vcmp.eq.s32.totalorder %v1625, %v1641
        %vm1662 = vcmp.eq.s32.totalorder %v1625, %v1645
        %vm1663 = vcmp.eq.s32.totalorder %v1625, %v1649
        %vm1664 = vcmp.eq.s32.totalorder %v1625, %v1653
        %vm1665 = vcmp.eq.s32.totalorder %v1625, %v1657
        %v1666 = vsel %vm1658, 1, 0
        %v1667 = vsel %vm1659, 1, 0
        %v1668 = vsel %vm1660, 1, 0
        %v1669 = vsel %vm1661, 1, 0
        %v1670 = vsel %vm1662, 1, 0
        %v1671 = vsel %vm1663, 1, 0
        %v1672 = vsel %vm1664, 1, 0
        %v1673 = vsel %vm1665, 1, 0
        %v1674 = vcvt.s32.f32 %v1666
        %v1675 = vcvt.s32.f32 %v1667
        %v1676 = vcvt.s32.f32 %v1668
        %v1677 = vcvt.s32.f32 %v1669
        %v1678 = vcvt.s32.f32 %v1670
        %v1679 = vcvt.s32.f32 %v1671
        %v1680 = vcvt.s32.f32 %v1672
        %v1681 = vcvt.s32.f32 %v1673
        %v1682 = vld [vmem:[#allocation2] sm:$0xff]
        %1683 = vmatprep.subr.mxu0 0.0
        %1684 = vmatpush1.msra.mxu0 %v1495
        %1685 = vmatprep.subr.mxu0 0.0
        %1686 = vmatpush1.msra.mxu0 %v1496
        %1687 = vmatprep.subr.mxu0 0.0
        %1688 = vmatpush1.msra.mxu0 %v1497
        %1689 = vmatprep.subr.mxu0 0.0
        %1690 = vmatpush1.msra.mxu0 %v1498
        %1691 = vmatprep.subr.mxu0 0.0
        %1692 = vmatpush1.msra.mxu0 %v1499
        %1693 = vmatprep.subr.mxu0 0.0
        %1694 = vmatpush1.msra.mxu0 %v1500
        %1695 = vmatprep.subr.mxu0 0.0
        %1696 = vmatpush1.msra.mxu0 %v1501
        %1697 = vmatprep.subr.mxu0 0.0
        %1698 = vmatpush1.msra.mxu0 %v1502
        %1699 = vmatprep.subr.mxu0 0.0
        %1700 = vmatpush1.msra.mxu0 %v1503
        %1701 = vmatprep.subr.mxu0 0.0
        %1702 = vmatpush1.msra.mxu0 %v1504
        %1703 = vmatprep.subr.mxu0 0.0
        %1704 = vmatpush1.msra.mxu0 %v1505
        %1705 = vmatprep.subr.mxu0 0.0
        %1706 = vmatpush1.msra.mxu0 %v1506
        %1707 = vmatprep.subr.mxu0 0.0
        %1708 = vmatpush1.msra.mxu0 %v1507
        %1709 = vmatprep.subr.mxu0 0.0
        %1710 = vmatpush1.msra.mxu0 %v1508
        %1711 = vmatprep.subr.mxu0 0.0
        %1712 = vmatpush1.msra.mxu0 %v1509
        %1713 = vmatprep.subr.mxu0 0.0
        %1714 = vmatpush1.msra.mxu0 %v1510
        %1715 = vmatprep.subr.mxu0 0.0
        %1716 = vmatpush1.msra.mxu0 %v1511
        %1717 = vmatprep.subr.mxu0 0.0
        %1718 = vmatpush1.msra.mxu0 %v1512
        %1719 = vmatprep.subr.mxu0 0.0
        %1720 = vmatpush1.msra.mxu0 %v1513
        %1721 = vmatprep.subr.mxu0 0.0
        %1722 = vmatpush1.msra.mxu0 %v1514
        %1723 = vmatprep.subr.mxu0 0.0
        %1724 = vmatpush1.msra.mxu0 %v1515
        %1725 = vmatprep.subr.mxu0 0.0
        %1726 = vmatpush1.msra.mxu0 %v1516
        %1727 = vmatprep.subr.mxu0 0.0
        %1728 = vmatpush1.msra.mxu0 %v1517
        %1729 = vmatprep.subr.mxu0 0.0
        %1730 = vmatpush1.msra.mxu0 %v1518
        %1731 = vmatprep.subr.mxu0 0.0
        %1732 = vmatpush1.msra.mxu0 %v1519
        %1733 = vmatprep.subr.mxu0 0.0
        %1734 = vmatpush1.msra.mxu0 %v1520
        %1735 = vmatprep.subr.mxu0 0.0
        %1736 = vmatpush1.msra.mxu0 %v1521
        %1737 = vmatprep.subr.mxu0 0.0
        %1738 = vmatpush1.msra.mxu0 %v1522
        %1739 = vmatprep.subr.mxu0 0.0
        %1740 = vmatpush1.msra.mxu0 %v1523
        %1741 = vmatprep.subr.mxu0 0.0
        %1742 = vmatpush1.msra.mxu0 %v1524
        %1743 = vmatprep.subr.mxu0 0.0
        %1744 = vmatpush1.msra.mxu0 %v1525
        %1745 = vmatprep.subr.mxu0 0.0
        %1746 = vmatpush1.msra.mxu0 %v1526
        %1747 = vmatprep.mubr.f32.mxu0 %v1675
        %1748 = vmatmul.mubr.f32.gmra.mrb[0].mxu0 %v1674
        %v1749 = vpop.f32.mrb[0].mxu0
        %v1750 = vadd.f32 0.0, %v1749
        %v1751 = vpop.f32.mrb[0].mxu0
        %1752 = vdwg.mxu0
        %1753 = vmatprep.subr.mxu0 0.0
        %1754 = vmatpush1.msra.mxu0 %v1527
        %1755 = vmatprep.subr.mxu0 0.0
        %1756 = vmatpush1.msra.mxu0 %v1528
        %1757 = vmatprep.subr.mxu0 0.0
        %1758 = vmatpush1.msra.mxu0 %v1529
        %1759 = vmatprep.subr.mxu0 0.0
        %1760 = vmatpush1.msra.mxu0 %v1530
        %1761 = vmatprep.subr.mxu0 0.0
        %1762 = vmatpush1.msra.mxu0 %v1531
        %1763 = vmatprep.subr.mxu0 0.0
        %1764 = vmatpush1.msra.mxu0 %v1532
        %1765 = vmatprep.subr.mxu0 0.0
        %1766 = vmatpush1.msra.mxu0 %v1533
        %1767 = vmatprep.subr.mxu0 0.0
        %1768 = vmatpush1.msra.mxu0 %v1534
        %1769 = vmatprep.subr.mxu0 0.0
        %1770 = vmatpush1.msra.mxu0 %v1535
        %1771 = vmatprep.subr.mxu0 0.0
        %1772 = vmatpush1.msra.mxu0 %v1536
        %1773 = vmatprep.subr.mxu0 0.0
        %1774 = vmatpush1.msra.mxu0 %v1537
        %1775 = vmatprep.subr.mxu0 0.0
        %1776 = vmatpush1.msra.mxu0 %v1538
        %1777 = vmatprep.subr.mxu0 0.0
        %1778 = vmatpush1.msra.mxu0 %v1539
        %1779 = vmatprep.subr.mxu0 0.0
        %1780 = vmatpush1.msra.mxu0 %v1540
        %1781 = vmatprep.subr.mxu0 0.0
        %1782 = vmatpush1.msra.mxu0 %v1541
        %1783 = vmatprep.subr.mxu0 0.0
        %1784 = vmatpush1.msra.mxu0 %v1542
        %1785 = vmatprep.subr.mxu0 0.0
        %1786 = vmatpush1.msra.mxu0 %v1543
        %1787 = vmatprep.subr.mxu0 0.0
        %1788 = vmatpush1.msra.mxu0 %v1544
        %1789 = vmatprep.subr.mxu0 0.0
        %1790 = vmatpush1.msra.mxu0 %v1545
        %1791 = vmatprep.subr.mxu0 0.0
        %1792 = vmatpush1.msra.mxu0 %v1546
        %1793 = vmatprep.subr.mxu0 0.0
        %1794 = vmatpush1.msra.mxu0 %v1547
        %1795 = vmatprep.subr.mxu0 0.0
        %1796 = vmatpush1.msra.mxu0 %v1548
        %1797 = vmatprep.subr.mxu0 0.0
        %1798 = vmatpush1.msra.mxu0 %v1549
        %1799 = vmatprep.subr.mxu0 0.0
        %1800 = vmatpush1.msra.mxu0 %v1550
        %1801 = vmatprep.subr.mxu0 0.0
        %1802 = vmatpush1.msra.mxu0 %v1551
        %1803 = vmatprep.subr.mxu0 0.0
        %1804 = vmatpush1.msra.mxu0 %v1552
        %1805 = vmatprep.subr.mxu0 0.0
        %1806 = vmatpush1.msra.mxu0 %v1553
        %1807 = vmatprep.subr.mxu0 0.0
        %1808 = vmatpush1.msra.mxu0 %v1554
        %1809 = vmatprep.subr.mxu0 0.0
        %1810 = vmatpush1.msra.mxu0 %v1555
        %1811 = vmatprep.subr.mxu0 0.0
        %1812 = vmatpush1.msra.mxu0 %v1556
        %1813 = vmatprep.subr.mxu0 0.0
        %1814 = vmatpush1.msra.mxu0 %v1557
        %1815 = vmatprep.subr.mxu0 0.0
        %1816 = vmatpush1.msra.mxu0 %v1558
        %1817 = vmatprep.mubr.f32.mxu0 %v1677
        %1818 = vmatmul.mubr.f32.gmra.mrb[0].mxu0 %v1676
        %v1819 = vpop.f32.mrb[0].mxu0
        %v1820 = vadd.f32 %v1750, %v1819
        %v1821 = vpop.f32.mrb[0].mxu0
        %1822 = vdwg.mxu0
        %1823 = vmatprep.subr.mxu0 0.0
        %1824 = vmatpush1.msra.mxu0 %v1559
        %1825 = vmatprep.subr.mxu0 0.0
        %1826 = vmatpush1.msra.mxu0 %v1560
        %1827 = vmatprep.subr.mxu0 0.0
        %1828 = vmatpush1.msra.mxu0 %v1561
        %1829 = vmatprep.subr.mxu0 0.0
        %1830 = vmatpush1.msra.mxu0 %v1562
        %1831 = vmatprep.subr.mxu0 0.0
        %1832 = vmatpush1.msra.mxu0 %v1563
        %1833 = vmatprep.subr.mxu0 0.0
        %1834 = vmatpush1.msra.mxu0 %v1564
        %1835 = vmatprep.subr.mxu0 0.0
        %1836 = vmatpush1.msra.mxu0 %v1565
        %1837 = vmatprep.subr.mxu0 0.0
        %1838 = vmatpush1.msra.mxu0 %v1566
        %1839 = vmatprep.subr.mxu0 0.0
        %1840 = vmatpush1.msra.mxu0 %v1567
        %1841 = vmatprep.subr.mxu0 0.0
        %1842 = vmatpush1.msra.mxu0 %v1568
        %1843 = vmatprep.subr.mxu0 0.0
        %1844 = vmatpush1.msra.mxu0 %v1569
        %1845 = vmatprep.subr.mxu0 0.0
        %1846 = vmatpush1.msra.mxu0 %v1570
        %1847 = vmatprep.subr.mxu0 0.0
        %1848 = vmatpush1.msra.mxu0 %v1571
        %1849 = vmatprep.subr.mxu0 0.0
        %1850 = vmatpush1.msra.mxu0 %v1572
        %1851 = vmatprep.subr.mxu0 0.0
        %1852 = vmatpush1.msra.mxu0 %v1573
        %1853 = vmatprep.subr.mxu0 0.0
        %1854 = vmatpush1.msra.mxu0 %v1574
        %1855 = vmatprep.subr.mxu0 0.0
        %1856 = vmatpush1.msra.mxu0 %v1575
        %1857 = vmatprep.subr.mxu0 0.0
        %1858 = vmatpush1.msra.mxu0 %v1576
        %1859 = vmatprep.subr.mxu0 0.0
        %1860 = vmatpush1.msra.mxu0 %v1577
        %1861 = vmatprep.subr.mxu0 0.0
        %1862 = vmatpush1.msra.mxu0 %v1578
        %1863 = vmatprep.subr.mxu0 0.0
        %1864 = vmatpush1.msra.mxu0 %v1579
        %1865 = vmatprep.subr.mxu0 0.0
        %1866 = vmatpush1.msra.mxu0 %v1580
        %1867 = vmatprep.subr.mxu0 0.0
        %1868 = vmatpush1.msra.mxu0 %v1581
        %1869 = vmatprep.subr.mxu0 0.0
        %1870 = vmatpush1.msra.mxu0 %v1582
        %1871 = vmatprep.subr.mxu0 0.0
        %1872 = vmatpush1.msra.mxu0 %v1583
        %1873 = vmatprep.subr.mxu0 0.0
        %1874 = vmatpush1.msra.mxu0 %v1584
        %1875 = vmatprep.subr.mxu0 0.0
        %1876 = vmatpush1.msra.mxu0 %v1585
        %1877 = vmatprep.subr.mxu0 0.0
        %1878 = vmatpush1.msra.mxu0 %v1586
        %1879 = vmatprep.subr.mxu0 0.0
        %1880 = vmatpush1.msra.mxu0 %v1587
        %1881 = vmatprep.subr.mxu0 0.0
        %1882 = vmatpush1.msra.mxu0 %v1588
        %1883 = vmatprep.subr.mxu0 0.0
        %1884 = vmatpush1.msra.mxu0 %v1589
        %1885 = vmatprep.subr.mxu0 0.0
        %1886 = vmatpush1.msra.mxu0 %v1590
        %1887 = vmatprep.mubr.f32.mxu0 %v1679
        %1888 = vmatmul.mubr.f32.gmra.mrb[0].mxu0 %v1678
        %v1889 = vpop.f32.mrb[0].mxu0
        %v1890 = vadd.f32 %v1820, %v1889
        %v1891 = vpop.f32.mrb[0].mxu0
        %1892 = vdwg.mxu0
        %1893 = vmatprep.subr.mxu0 0.0
        %1894 = vmatpush1.msra.mxu0 %v1591
        %1895 = vmatprep.subr.mxu0 0.0
        %1896 = vmatpush1.msra.mxu0 %v1592
        %1897 = vmatprep.subr.mxu0 0.0
        %1898 = vmatpush1.msra.mxu0 %v1593
        %1899 = vmatprep.subr.mxu0 0.0
        %1900 = vmatpush1.msra.mxu0 %v1594
        %1901 = vmatprep.subr.mxu0 0.0
        %1902 = vmatpush1.msra.mxu0 %v1595
        %1903 = vmatprep.subr.mxu0 0.0
        %1904 = vmatpush1.msra.mxu0 %v1596
        %1905 = vmatprep.subr.mxu0 0.0
        %1906 = vmatpush1.msra.mxu0 %v1597
        %1907 = vmatprep.subr.mxu0 0.0
        %1908 = vmatpush1.msra.mxu0 %v1598
        %1909 = vmatprep.subr.mxu0 0.0
        %1910 = vmatpush1.msra.mxu0 %v1599
        %1911 = vmatprep.subr.mxu0 0.0
        %1912 = vmatpush1.msra.mxu0 %v1600
        %1913 = vmatprep.subr.mxu0 0.0
        %1914 = vmatpush1.msra.mxu0 %v1601
        %1915 = vmatprep.subr.mxu0 0.0
        %1916 = vmatpush1.msra.mxu0 %v1602
        %1917 = vmatprep.subr.mxu0 0.0
        %1918 = vmatpush1.msra.mxu0 %v1603
        %1919 = vmatprep.subr.mxu0 0.0
        %1920 = vmatpush1.msra.mxu0 %v1604
        %1921 = vmatprep.subr.mxu0 0.0
        %1922 = vmatpush1.msra.mxu0 %v1605
        %1923 = vmatprep.subr.mxu0 0.0
        %1924 = vmatpush1.msra.mxu0 %v1606
        %1925 = vmatprep.subr.mxu0 0.0
        %1926 = vmatpush1.msra.mxu0 %v1607
        %1927 = vmatprep.subr.mxu0 0.0
        %1928 = vmatpush1.msra.mxu0 %v1608
        %1929 = vmatprep.subr.mxu0 0.0
        %1930 = vmatpush1.msra.mxu0 %v1609
        %1931 = vmatprep.subr.mxu0 0.0
        %1932 = vmatpush1.msra.mxu0 %v1610
        %1933 = vmatprep.subr.mxu0 0.0
        %1934 = vmatpush1.msra.mxu0 %v1611
        %1935 = vmatprep.subr.mxu0 0.0
        %1936 = vmatpush1.msra.mxu0 %v1612
        %1937 = vmatprep.subr.mxu0 0.0
        %1938 = vmatpush1.msra.mxu0 %v1613
        %1939 = vmatprep.subr.mxu0 0.0
        %1940 = vmatpush1.msra.mxu0 %v1614
        %1941 = vmatprep.subr.mxu0 0.0
        %1942 = vmatpush1.msra.mxu0 %v1615
        %1943 = vmatprep.subr.mxu0 0.0
        %1944 = vmatpush1.msra.mxu0 %v1616
        %1945 = vmatprep.subr.mxu0 0.0
        %1946 = vmatpush1.msra.mxu0 %v1617
        %1947 = vmatprep.subr.mxu0 0.0
        %1948 = vmatpush1.msra.mxu0 %v1618
        %1949 = vmatprep.subr.mxu0 0.0
        %1950 = vmatpush1.msra.mxu0 %v1619
        %1951 = vmatprep.subr.mxu0 0.0
        %1952 = vmatpush1.msra.mxu0 %v1620
        %1953 = vmatprep.subr.mxu0 0.0
        %1954 = vmatpush1.msra.mxu0 %v1621
        %1955 = vmatprep.subr.mxu0 0.0
        %1956 = vmatpush1.msra.mxu0 %v1622
        %1957 = vmatprep.mubr.f32.mxu0 %v1681
        %1958 = vmatmul.mubr.f32.gmra.mrb[0].mxu0 %v1680
        %v1959 = vpop.f32.mrb[0].mxu0
        %v1960 = vadd.f32 %v1890, %v1959
        %v1961 = vpop.f32.mrb[0].mxu0
        %1962 = vdwg.mxu0
        %v1963 = vadd.f32 %v1682, %v1960
        %1964 = vst [vmem:[#allocation2] sm:$0xff] %v1963
        %v1965 = vld [vmem:[#allocation3] sm:$0xff]
        %v1966 = vadd.f32 %v1674, %v1675
        %v1967 = vadd.f32 %v1966, %v1676
        %v1968 = vadd.f32 %v1967, %v1677
        %v1969 = vadd.f32 %v1968, %v1678
        %v1970 = vadd.f32 %v1969, %v1679
        %v1971 = vadd.f32 %v1970, %v1680
        %v1972 = vadd.f32 %v1971, %v1681
        %1973 = vadd.xlane.f32.xlu0 %v1972
        %v1974 = vpop.xlane.xlu0 %1973
        %v1975 = vadd.f32 %v1965, %v1974
        %vm1976 = vcmask 7168
        %1977 = vst.msk [vmem:[#allocation3] sm:$0xff] %vm1976, %v1975
        // Predicated region
        $region65: #{tpu_custom_call.1} parent=43 // pred_check
          %p1978 = pneg %p360
        $region66: #{tpu_custom_call.1} parent=43 // pred_check_branch
          %1980 = sbr.rel (%p1978) target = $region68
        $region67: #{tpu_custom_call.1} parent=43 // pred_region
          %v1981 = vld [vmem:[#allocation2] sm:$0xff]
          %v1982 = vld [vmem:[#allocation10] sm:$0xff]
          %v1983 = vld [vmem:[#allocation10 + $0x8] sm:$0xff]
          %v1984 = vld [vmem:[#allocation10 + $0x10] sm:$0xff]
          %v1985 = vld [vmem:[#allocation10 + $0x18] sm:$0xff]
          %v1986 = vld [vmem:[#allocation10 + $0x20] sm:$0xff]
          %v1987 = vld [vmem:[#allocation10 + $0x28] sm:$0xff]
          %v1988 = vld [vmem:[#allocation10 + $0x30] sm:$0xff]
          %v1989 = vld [vmem:[#allocation10 + $0x38] sm:$0xff]
          %v1990 = vld [vmem:[#allocation10 + $0x40] sm:$0xff]
          %v1991 = vld [vmem:[#allocation10 + $0x48] sm:$0xff]
          %v1992 = vld [vmem:[#allocation10 + $0x50] sm:$0xff]
          %v1993 = vld [vmem:[#allocation10 + $0x58] sm:$0xff]
          %v1994 = vld [vmem:[#allocation10 + $0x60] sm:$0xff]
          %v1995 = vld [vmem:[#allocation10 + $0x68] sm:$0xff]
          %v1996 = vld [vmem:[#allocation10 + $0x70] sm:$0xff]
          %v1997 = vld [vmem:[#allocation10 + $0x78] sm:$0xff]
          %v1998 = vld [vmem:[#allocation3] sm:$0xff]
          %v1999 = vld [vmem:[%s5] sm:$0x1]
          %2001 = vset.pattern.permute.xlu0 0
          %2002 = vperm.xlu0 %2001, %v1998
          %v2003 = vpop.permute.xlu0 %2002
          %v2006 = vlaneseq
          %v2007 = vshrl.u32 %v2006, 7
          %v2008 = vsub.s32 0, %v2007
          %v2009 = vrot.slane %v1999, %v2008
          %v2011 = vmul.f32 %v2003, %v2009
          %2012 = vmatprep.subr.mxu0 0.0
          %2013 = vmatpush1.msra.mxu0 %v1982
          %2014 = vmatprep.subr.mxu0 0.0
          %2015 = vmatpush1.msra.mxu0 %v1983
          %2016 = vmatprep.subr.mxu0 0.0
          %2017 = vmatpush1.msra.mxu0 %v1984
          %2018 = vmatprep.subr.mxu0 0.0
          %2019 = vmatpush1.msra.mxu0 %v1985
          %2020 = vmatprep.subr.mxu0 0.0
          %2021 = vmatpush1.msra.mxu0 %v1986
          %2022 = vmatprep.subr.mxu0 0.0
          %2023 = vmatpush1.msra.mxu0 %v1987
          %2024 = vmatprep.subr.mxu0 0.0
          %2025 = vmatpush1.msra.mxu0 %v1988
          %2026 = vmatprep.subr.mxu0 0.0
          %2027 = vmatpush1.msra.mxu0 %v1989
          %2028 = vmatprep.subr.mxu0 0.0
          %2029 = vmatpush1.msra.mxu0 %v1990
          %2030 = vmatprep.subr.mxu0 0.0
          %2031 = vmatpush1.msra.mxu0 %v1991
          %2032 = vmatprep.subr.mxu0 0.0
          %2033 = vmatpush1.msra.mxu0 %v1992
          %2034 = vmatprep.subr.mxu0 0.0
          %2035 = vmatpush1.msra.mxu0 %v1993
          %2036 = vmatprep.subr.mxu0 0.0
          %2037 = vmatpush1.msra.mxu0 %v1994
          %2038 = vmatprep.subr.mxu0 0.0
          %2039 = vmatpush1.msra.mxu0 %v1995
          %2040 = vmatprep.subr.mxu0 0.0
          %2041 = vmatpush1.msra.mxu0 %v1996
          %2042 = vmatprep.subr.mxu0 0.0
          %2043 = vmatpush1.msra.mxu0 %v1997
          %2044 = vmatprep.subr.mxu0 0.0
          %2045 = vmatpush1.msra.mxu0 0.0
          %2046 = vmatprep.subr.mxu0 0.0
          %2047 = vmatpush1.msra.mxu0 0.0
          %2048 = vmatprep.subr.mxu0 0.0
          %2049 = vmatpush1.msra.mxu0 0.0
          %2050 = vmatprep.subr.mxu0 0.0
          %2051 = vmatpush1.msra.mxu0 0.0
          %2052 = vmatprep.subr.mxu0 0.0
          %2053 = vmatpush1.msra.mxu0 0.0
          %2054 = vmatprep.subr.mxu0 0.0
          %2055 = vmatpush1.msra.mxu0 0.0
          %2056 = vmatprep.subr.mxu0 0.0
          %2057 = vmatpush1.msra.mxu0 0.0
          %2058 = vmatprep.subr.mxu0 0.0
          %2059 = vmatpush1.msra.mxu0 0.0
          %2060 = vmatprep.subr.mxu0 0.0
          %2061 = vmatpush1.msra.mxu0 0.0
          %2062 = vmatprep.subr.mxu0 0.0
          %2063 = vmatpush1.msra.mxu0 0.0
          %2064 = vmatprep.subr.mxu0 0.0
          %2065 = vmatpush1.msra.mxu0 0.0
          %2066 = vmatprep.subr.mxu0 0.0
          %2067 = vmatpush1.msra.mxu0 0.0
          %2068 = vmatprep.subr.mxu0 0.0
          %2069 = vmatpush1.msra.mxu0 0.0
          %2070 = vmatprep.subr.mxu0 0.0
          %2071 = vmatpush1.msra.mxu0 0.0
          %2072 = vmatprep.subr.mxu0 0.0
          %2073 = vmatpush1.msra.mxu0 0.0
          %2074 = vmatprep.subr.mxu0 0.0
          %2075 = vmatpush1.msra.mxu0 0.0
          %2076 = vmatprep.mubr.f32.mxu0 0.0
          %2077 = vmatmul.mubr.f32.gmra.mrb[0].mxu0 %v1981
          %v2078 = vpop.f32.mrb[0].mxu0
          %v2079 = vadd.f32 %v2011, %v2078
          %v2080 = vpop.f32.mrb[0].mxu0
          %2081 = vdwg.mxu0
          %2082 = vst [vmem:[%s354] sm:$0xff] %v2079
        $region68: #{tpu_custom_call.1} parent=43 // pred_fallthru
          _
        %s2083 = sand.u32 %s187, 1
        %s2084 = scalar_lea.sflag [#allocation6], %s2083
        %s2085 = sand.u32 %s187, 1
        %s2086 = smul.addr %s2085, 8
        %s2087 = scalar_lea.vmem [#allocation12], %s2086
        // Predicated region
        $region69: #{tpu_custom_call.1} parent=43 // pred_check
          %p2088 = pneg %p197
        $region70: #{tpu_custom_call.1} parent=43 // pred_check_branch
          %2090 = sbr.rel (%p2088) target = $region72
        $region71: #{tpu_custom_call.1} parent=43 // pred_region
          %s2092 = ssub.s32 128, 128
          %2093 = vsyncadd %s2084, %s2092
          %s2094 = smul.addr %s31, 128
          %s2095 = scalar_lea.hbm %s6, %s2094
          %s2097 = sshll.u32 %s2087, 4
          %s2098 = int_to_ptr.vmem [resolvable:$true] %s2097
          %2100 = dma.vmem_to_hbm [thread:$0]  %s2098, 128, %s2095, %s2084
        $region72: #{tpu_custom_call.1} parent=43 // pred_fallthru
          _
      $region44: #{tpu_custom_call.1} parent=5 // pred_fallthru
        _
      %p2101 = scmp.le.s32.totalorder 2, %s22
      // Predicated region
      $region73: #{tpu_custom_call.1} parent=5 // pred_check
        %p2102 = pneg %p2101
      $region74: #{tpu_custom_call.1} parent=5 // pred_check_branch
        %2104 = sbr.rel (%p2102) target = $region76
      $region75: #{tpu_custom_call.1} parent=5 // pred_region
        %s2105 = ssub.s32 %s22, 2
        // Predicated region
        $region77: #{tpu_custom_call.1} parent=75 // pred_check
          %p2106 = pneg %p203
        $region78: #{tpu_custom_call.1} parent=75 // pred_check_branch
          %2108 = sbr.rel (%p2106) target = $region80
        $region79: #{tpu_custom_call.1} parent=75 // pred_region
          %s2109 = sand.u32 %s188, 1
          %s2110 = scalar_lea.sflag [#allocation6], %s2109
          %s2111 = sand.u32 %s188, 1
          %s2112 = smul.addr %s2111, 8
          %s2113 = scalar_lea.vmem [#allocation12], %s2112
          %2114 = dma.done %s2110, 128
        $region80: #{tpu_custom_call.1} parent=75 // pred_fallthru
          _
      $region76: #{tpu_custom_call.1} parent=5 // pred_fallthru
        _
    $region6: #{tpu_custom_call.1} parent=1 // loop_footer
      %s26 = sadd.s32 1, %s22
    $region7: #{tpu_custom_call.1} parent=1 // loop_footer_branch
      %21 = sbr.rel target = $region3
    $region8: #{tpu_custom_call.1} parent=1 // loop_exit
      _
    %2115 = vsyncpa [#allocation5], 1
    %s2116 = scalar_lea.sflag [#allocation5], 1
    %2117 = vsyncpa %s2116, 1
    %2118 = vsyncpa [#allocation8], 1
    %s2119 = scalar_lea.sflag [#allocation8], 1
    %2120 = vsyncpa %s2119, 1
    %2121 = vsyncpa [#allocation11], 1
    %2122 = vsyncpa [#allocation6], 1
    %s2123 = scalar_lea.sflag [#allocation6], 1
    %2124 = vsyncpa %s2123, 1

</llo_original>
